<compile_context>
chip_gen: v7x
topology: tpu7x:2x2x1
jax: 0.10.0
libtpu: 0.0.40
codegen_flags: <defaults>
</compile_context>

<pallas_src>
import functools

import jax
import jax.numpy as jnp
from jax import lax
from jax.experimental import pallas as pl
from jax.experimental.pallas import tpu as pltpu


# ----------------------------------------------------------------------------
# Fused kernel: multi-layer bi-RNN + BatchNorm(batch stats) + Linear.
# ----------------------------------------------------------------------------
def fused_birnn_kernel(*refs, num_layers, T, B, H):
    """refs layout:
         [x (B, T, Din),
          (wih_cat (Din_l, 2H), whh_blk (2H, 2H), bias_cat (1, 2H)) * L,
          bn_gamma (1,F), bn_beta (1,F), w_out (F,C), b_out (1,C),
          out (B,C),                                  # output ref
          xT_scr (T*B,Din), pre_scr (T*B,2H), y_scr (T*B,2H)]   # VMEM scratch
    """
    idx = 0
    x_ref = refs[idx]; idx += 1
    layer_refs = []
    for _ in range(num_layers):
        layer_refs.append(tuple(refs[idx:idx + 3]))
        idx += 3
    gamma_ref, beta_ref, wout_ref, bout_ref = refs[idx:idx + 4]; idx += 4
    out_ref = refs[idx]; idx += 1
    xT_scr, pre_scr, y_scr = refs[idx:idx + 3]

    H2 = 2 * H

    # ---- (B,T,Din) -> time-major flat (T*B, Din): one-time in-kernel copies
    # (replaces the wrapper-side transpose XLA op + HBM round-trip).
    for t in range(T):
        xT_scr[pl.ds(t * B, B), :] = x_ref[:, t, :]

    h_list = []                       # h_n order: [l0_fwd|l0_bwd, l1_fwd|l1_bwd, ...]
    cur_in_ref = xT_scr               # layer 0 input: (T*B, Din)

    for _layer, (wih_ref, whhblk_ref, bias_ref) in enumerate(layer_refs):
        # Hoisted input projection: ONE batched GEMM for the whole sequence,
        # both directions at once, summed biases folded in.
        pre_scr[...] = (jnp.dot(cur_in_ref[...], wih_ref[...],
                                preferred_element_type=jnp.float32)
                        + bias_ref[...])

        # One-time in-place row-block reversal of the bwd half so that step t
        # reads a single contiguous (B, 2H) tile:
        #   pre_scr[t*B:(t+1)*B, :] == [ pre_fwd(time t) | pre_bwd(time T-1-t) ]
        for t in range(T // 2):
            lo = t * B
            hi = (T - 1 - t) * B
            a = pre_scr[pl.ds(lo, B), H:H2]
            b = pre_scr[pl.ds(hi, B), H:H2]
            pre_scr[pl.ds(lo, B), H:H2] = b
            pre_scr[pl.ds(hi, B), H:H2] = a

        whh = whhblk_ref[...]         # (2H, 2H) block-diag, resident across loop

        def step(t, h):
            # Serial chain: one (B,2H) load -> one matmul -> one tanh.
            # Offsets are multiples of B=8 (sublane-aligned); loop is fully
            # unrolled so they constant-fold.
            r = t * B
            rb = (T - 1 - t) * B
            h = jnp.tanh(pre_scr[pl.ds(r, B), :]
                         + jnp.dot(h, whh, preferred_element_type=jnp.float32))
            # Layer output stored at the *actual* time index so y_scr is
            # directly the next layer's concat(y_f, y_b) input.  These stores
            # are off the carry chain (nothing in the loop depends on them).
            y_scr[pl.ds(r, B), 0:H] = h[:, 0:H]
            y_scr[pl.ds(rb, B), H:H2] = h[:, H:H2]
            return h

        h_last = lax.fori_loop(0, T, step, jnp.zeros((B, H2), jnp.float32),
                               unroll=True)
        h_list.append(h_last)         # already [h_fwd(T-1) | h_bwd(after full rev pass)]
        cur_in_ref = y_scr            # next layer consumes concat(y_f, y_b)

    # h_n.permute(1,0,2).reshape(B, L*2*H)  ==  per-batch concat over (layer, dir)
    h = h_list[0] if num_layers == 1 else jnp.concatenate(h_list, axis=-1)

    # BatchNorm1d with training-mode batch statistics (biased variance).
    # TODO(synk): eval-mode would use running_mean / running_var instead.
    mean = jnp.mean(h, axis=0, keepdims=True)
    var = jnp.mean((h - mean) ** 2, axis=0, keepdims=True)
    hn = (h - mean) * lax.rsqrt(var + 1e-5)
    hn = hn * gamma_ref[...] + beta_ref[...]

    # Linear head (module's softmax is never applied in forward()).
    out_ref[...] = (jnp.dot(hn, wout_ref[...],
                            preferred_element_type=jnp.float32)
                    + bout_ref[...])


# ----------------------------------------------------------------------------
# One-time parameter packing (kept OFF the per-call path).
# ----------------------------------------------------------------------------
def prepare_params(params, num_layers):
    H = params["layers"][0]["fwd"]["whh"].shape[0]
    z = jnp.zeros((H, H), jnp.float32)
    flat = []
    for layer in range(num_layers):
        lf = params["layers"][layer]["fwd"]
        lb = params["layers"][layer]["bwd"]
        wih_cat = jnp.concatenate([lf["wih"], lb["wih"]], axis=1)          # (Din_l, 2H)
        whh_blk = jnp.block([[lf["whh"], z], [z, lb["whh"]]])              # (2H, 2H)
        bias_cat = jnp.concatenate([lf["bih"] + lf["bhh"],
                                    lb["bih"] + lb["bhh"]], axis=1)        # (1, 2H)
        flat += [wih_cat, whh_blk, bias_cat]
    flat += [params["bn_gamma"], params["bn_beta"],
             params["w_out"], params["b_out"]]
    return tuple(flat)


# ----------------------------------------------------------------------------
# Full TC_base ('bi-rnn') forward: one pallas_call.
# ----------------------------------------------------------------------------
@functools.partial(jax.jit, static_argnames=("num_layers",))
def tc_base_forward(features, flat_params, num_layers):
    B, T, Din = features.shape
    H2 = flat_params[1].shape[0]       # layer-0 whh_blk is (2H, 2H)
    H = H2 // 2
    C = flat_params[-2].shape[1]       # w_out is (F, C)

    kernel = functools.partial(fused_birnn_kernel,
                               num_layers=num_layers, T=T, B=B, H=H)
    return pl.pallas_call(
        kernel,
        out_shape=jax.ShapeDtypeStruct((B, C), jnp.float32),
        scratch_shapes=[
            pltpu.VMEM((T * B, Din), jnp.float32),   # time-major input copy
            pltpu.VMEM((T * B, H2), jnp.float32),    # hoisted projection / step tiles
            pltpu.VMEM((T * B, H2), jnp.float32),    # layer output (next layer input)
        ],
    )(features, *flat_params)


# ----------------------------------------------------------------------------
# Pure-JAX reference (correctness check).
# ----------------------------------------------------------------------------
def ref_rnn_layer_dir(x_seq, wih, whh, bih, bhh):
    B = x_seq.shape[1]
    H = whh.shape[0]

    def step(h, x):
        h_new = jnp.tanh(x @ wih + h @ whh + bih[0] + bhh[0])
        return h_new, h_new

    h_last, ys = jax.lax.scan(step, jnp.zeros((B, H), jnp.float32), x_seq)
    return ys, h_last


def ref_forward(features, params, num_layers):
    x_seq = jnp.transpose(features, (1, 0, 2))
    h_list = []
    for layer in range(num_layers):
        lf = params["layers"][layer]["fwd"]
        lb = params["layers"][layer]["bwd"]
        y_f, h_f = ref_rnn_layer_dir(x_seq, lf["wih"], lf["whh"], lf["bih"], lf["bhh"])
        y_b_rev, h_b = ref_rnn_layer_dir(x_seq[::-1], lb["wih"], lb["whh"], lb["bih"], lb["bhh"])
        y_b = y_b_rev[::-1]
        h_list += [h_f, h_b]
        x_seq = jnp.concatenate([y_f, y_b], axis=-1)
    h = jnp.concatenate(h_list, axis=-1)
    mean = h.mean(0, keepdims=True)
    var = ((h - mean) ** 2).mean(0, keepdims=True)
    hn = (h - mean) / jnp.sqrt(var + 1e-5) * params["bn_gamma"] + params["bn_beta"]
    return hn @ params["w_out"] + params["b_out"]


# ----------------------------------------------------------------------------
# Deterministic parameter init (PyTorch-style uniform(-1/sqrt(H), 1/sqrt(H))).
# ----------------------------------------------------------------------------
def init_params(key, in_features, hidden_dim, num_layers, class_num):
    bound = 1.0 / jnp.sqrt(hidden_dim)
    layers = []
    for layer in range(num_layers):
        din = in_features if layer == 0 else 2 * hidden_dim
        per_dir = {}
        for d in ("fwd", "bwd"):
            key, k1, k2, k3, k4 = jax.random.split(key, 5)
            per_dir[d] = {
                "wih": jax.random.uniform(k1, (din, hidden_dim), jnp.float32, -bound, bound),
                "whh": jax.random.uniform(k2, (hidden_dim, hidden_dim), jnp.float32, -bound, bound),
                "bih": jax.random.uniform(k3, (1, hidden_dim), jnp.float32, -bound, bound),
                "bhh": jax.random.uniform(k4, (1, hidden_dim), jnp.float32, -bound, bound),
            }
        layers.append(per_dir)

    out_hidden_dim = 2 * hidden_dim * num_layers
    key, kw, kb = jax.random.split(key, 3)
    lin_bound = 1.0 / jnp.sqrt(out_hidden_dim)
    params = {
        "layers": layers,
        "bn_gamma": jnp.ones((1, out_hidden_dim), jnp.float32),
        "bn_beta": jnp.zeros((1, out_hidden_dim), jnp.float32),
        "w_out": jax.random.uniform(kw, (out_hidden_dim, class_num), jnp.float32,
                                    -lin_bound, lin_bound),
        "b_out": jax.random.uniform(kb, (1, class_num), jnp.float32,
                                    -lin_bound, lin_bound),
    }
    return params


if __name__ == "__main__":
    # Module hyperparams: cell='bi-rnn', in_features=16, hidden=32, layers=2,
    # class_num=4, dropout_rate=0.0 (inter-layer dropout is a no-op).
    B, T, in_features, hidden_dim, num_layers, class_num = 8, 8, 16, 32, 2, 4

    root = jax.random.PRNGKey(0)
    k_x, k_p = jax.random.split(root)
    features = jax.random.normal(k_x, (B, T, in_features), jnp.float32)
    params = init_params(k_p, in_features, hidden_dim, num_layers, class_num)

    # One-time parameter packing (off the per-forward path).
    flat_params = prepare_params(params, num_layers)

    logits = tc_base_forward(features, flat_params, num_layers)
    logits = jax.block_until_ready(logits)

    ref = ref_forward(features, params, num_layers)
    assert logits.shape == (B, class_num)
    assert jnp.allclose(logits, ref, rtol=2e-3, atol=2e-3), (
        f"max abs err {jnp.max(jnp.abs(logits - ref))}")

    print("KERNEL_OK")
</pallas_src>

<mosaic_0001>
module attributes {stable_mosaic.version = 11 : i64} {
  func.func @fused_birnn_kernel(%arg0: memref<8x8x16xf32, #tpu.memory_space<vmem>>, %arg1: memref<16x64xf32, #tpu.memory_space<vmem>>, %arg2: memref<64x64xf32, #tpu.memory_space<vmem>>, %arg3: memref<1x64xf32, #tpu.memory_space<vmem>>, %arg4: memref<64x64xf32, #tpu.memory_space<vmem>>, %arg5: memref<64x64xf32, #tpu.memory_space<vmem>>, %arg6: memref<1x64xf32, #tpu.memory_space<vmem>>, %arg7: memref<1x128xf32, #tpu.memory_space<vmem>>, %arg8: memref<1x128xf32, #tpu.memory_space<vmem>>, %arg9: memref<128x4xf32, #tpu.memory_space<vmem>>, %arg10: memref<1x4xf32, #tpu.memory_space<vmem>>, %arg11: memref<8x4xf32, #tpu.memory_space<vmem>>, %arg12: memref<64x16xf32, #tpu.memory_space<vmem>>, %arg13: memref<64x64xf32, #tpu.memory_space<vmem>>, %arg14: memref<64x64xf32, #tpu.memory_space<vmem>>) attributes {dimension_semantics = [], scalar_prefetch = 0 : i64, scratch_operands = 3 : i64, tpu.core_type = #tpu.core_type<tc>} {
    %c0 = arith.constant 0 : index
    %c0_0 = arith.constant 0 : index
    %c0_1 = arith.constant 0 : index
    %0 = vector.load %arg0[%c0, %c0_0, %c0_1] : memref<8x8x16xf32, #tpu.memory_space<vmem>>, vector<8x1x16xf32>
    %1 = vector.shape_cast %0 : vector<8x1x16xf32> to vector<8x16xf32>
    %c0_2 = arith.constant 0 : index
    %c0_3 = arith.constant 0 : index
    %2 = vector.load %arg12[%c0_2, %c0_3] : memref<64x16xf32, #tpu.memory_space<vmem>>, vector<8x16xf32>
    tpu.vector_store %arg12[%c0_2, %c0_3], %1 {strides = array<i32>} : memref<64x16xf32, #tpu.memory_space<vmem>>, vector<8x16xf32>,
    %c0_4 = arith.constant 0 : index
    %c1 = arith.constant 1 : index
    %c0_5 = arith.constant 0 : index
    %3 = vector.load %arg0[%c0_4, %c1, %c0_5] : memref<8x8x16xf32, #tpu.memory_space<vmem>>, vector<8x1x16xf32>
    %4 = vector.shape_cast %3 : vector<8x1x16xf32> to vector<8x16xf32>
    %c8 = arith.constant 8 : index
    %c0_6 = arith.constant 0 : index
    %5 = vector.load %arg12[%c8, %c0_6] : memref<64x16xf32, #tpu.memory_space<vmem>>, vector<8x16xf32>
    tpu.vector_store %arg12[%c8, %c0_6], %4 {strides = array<i32>} : memref<64x16xf32, #tpu.memory_space<vmem>>, vector<8x16xf32>,
    %c0_7 = arith.constant 0 : index
    %c2 = arith.constant 2 : index
    %c0_8 = arith.constant 0 : index
    %6 = vector.load %arg0[%c0_7, %c2, %c0_8] : memref<8x8x16xf32, #tpu.memory_space<vmem>>, vector<8x1x16xf32>
    %7 = vector.shape_cast %6 : vector<8x1x16xf32> to vector<8x16xf32>
    %c16 = arith.constant 16 : index
    %c0_9 = arith.constant 0 : index
    %8 = vector.load %arg12[%c16, %c0_9] : memref<64x16xf32, #tpu.memory_space<vmem>>, vector<8x16xf32>
    tpu.vector_store %arg12[%c16, %c0_9], %7 {strides = array<i32>} : memref<64x16xf32, #tpu.memory_space<vmem>>, vector<8x16xf32>,
    %c0_10 = arith.constant 0 : index
    %c3 = arith.constant 3 : index
    %c0_11 = arith.constant 0 : index
    %9 = vector.load %arg0[%c0_10, %c3, %c0_11] : memref<8x8x16xf32, #tpu.memory_space<vmem>>, vector<8x1x16xf32>
    %10 = vector.shape_cast %9 : vector<8x1x16xf32> to vector<8x16xf32>
    %c24 = arith.constant 24 : index
    %c0_12 = arith.constant 0 : index
    %11 = vector.load %arg12[%c24, %c0_12] : memref<64x16xf32, #tpu.memory_space<vmem>>, vector<8x16xf32>
    tpu.vector_store %arg12[%c24, %c0_12], %10 {strides = array<i32>} : memref<64x16xf32, #tpu.memory_space<vmem>>, vector<8x16xf32>,
    %c0_13 = arith.constant 0 : index
    %c4 = arith.constant 4 : index
    %c0_14 = arith.constant 0 : index
    %12 = vector.load %arg0[%c0_13, %c4, %c0_14] : memref<8x8x16xf32, #tpu.memory_space<vmem>>, vector<8x1x16xf32>
    %13 = vector.shape_cast %12 : vector<8x1x16xf32> to vector<8x16xf32>
    %c32 = arith.constant 32 : index
    %c0_15 = arith.constant 0 : index
    %14 = vector.load %arg12[%c32, %c0_15] : memref<64x16xf32, #tpu.memory_space<vmem>>, vector<8x16xf32>
    tpu.vector_store %arg12[%c32, %c0_15], %13 {strides = array<i32>} : memref<64x16xf32, #tpu.memory_space<vmem>>, vector<8x16xf32>,
    %c0_16 = arith.constant 0 : index
    %c5 = arith.constant 5 : index
    %c0_17 = arith.constant 0 : index
    %15 = vector.load %arg0[%c0_16, %c5, %c0_17] : memref<8x8x16xf32, #tpu.memory_space<vmem>>, vector<8x1x16xf32>
    %16 = vector.shape_cast %15 : vector<8x1x16xf32> to vector<8x16xf32>
    %c40 = arith.constant 40 : index
    %c0_18 = arith.constant 0 : index
    %17 = vector.load %arg12[%c40, %c0_18] : memref<64x16xf32, #tpu.memory_space<vmem>>, vector<8x16xf32>
    tpu.vector_store %arg12[%c40, %c0_18], %16 {strides = array<i32>} : memref<64x16xf32, #tpu.memory_space<vmem>>, vector<8x16xf32>,
    %c0_19 = arith.constant 0 : index
    %c6 = arith.constant 6 : index
    %c0_20 = arith.constant 0 : index
    %18 = vector.load %arg0[%c0_19, %c6, %c0_20] : memref<8x8x16xf32, #tpu.memory_space<vmem>>, vector<8x1x16xf32>
    %19 = vector.shape_cast %18 : vector<8x1x16xf32> to vector<8x16xf32>
    %c48 = arith.constant 48 : index
    %c0_21 = arith.constant 0 : index
    %20 = vector.load %arg12[%c48, %c0_21] : memref<64x16xf32, #tpu.memory_space<vmem>>, vector<8x16xf32>
    tpu.vector_store %arg12[%c48, %c0_21], %19 {strides = array<i32>} : memref<64x16xf32, #tpu.memory_space<vmem>>, vector<8x16xf32>,
    %c0_22 = arith.constant 0 : index
    %c7 = arith.constant 7 : index
    %c0_23 = arith.constant 0 : index
    %21 = vector.load %arg0[%c0_22, %c7, %c0_23] : memref<8x8x16xf32, #tpu.memory_space<vmem>>, vector<8x1x16xf32>
    %22 = vector.shape_cast %21 : vector<8x1x16xf32> to vector<8x16xf32>
    %c56 = arith.constant 56 : index
    %c0_24 = arith.constant 0 : index
    %23 = vector.load %arg12[%c56, %c0_24] : memref<64x16xf32, #tpu.memory_space<vmem>>, vector<8x16xf32>
    tpu.vector_store %arg12[%c56, %c0_24], %22 {strides = array<i32>} : memref<64x16xf32, #tpu.memory_space<vmem>>, vector<8x16xf32>,
    %c0_25 = arith.constant 0 : index
    %c0_26 = arith.constant 0 : index
    %24 = vector.load %arg12[%c0_25, %c0_26] : memref<64x16xf32, #tpu.memory_space<vmem>>, vector<64x16xf32>
    %c0_27 = arith.constant 0 : index
    %c0_28 = arith.constant 0 : index
    %25 = vector.load %arg1[%c0_27, %c0_28] : memref<16x64xf32, #tpu.memory_space<vmem>>, vector<16x64xf32>
    %cst = arith.constant dense<0.000000e+00> : vector<64x64xf32>
    %26 = tpu.matmul %24, %25, %cst {dimension_numbers = #tpu.dot_dimension_numbers<[1], [0], [0], [1], [0, 0, 1, 1], [], []>} : vector<64x16xf32>, vector<16x64xf32>, vector<64x64xf32> -> vector<64x64xf32>
    %c0_29 = arith.constant 0 : index
    %c0_30 = arith.constant 0 : index
    %27 = vector.load %arg3[%c0_29, %c0_30] : memref<1x64xf32, #tpu.memory_space<vmem>>, vector<1x64xf32>
    %28 = vector.broadcast %27 : vector<1x64xf32> to vector<64x64xf32>
    %29 = arith.addf %26, %28 : vector<64x64xf32>
    %c0_31 = arith.constant 0 : index
    %c0_32 = arith.constant 0 : index
    %30 = vector.load %arg13[%c0_31, %c0_32] : memref<64x64xf32, #tpu.memory_space<vmem>>, vector<64x64xf32>
    tpu.vector_store %arg13[%c0_31, %c0_32], %29 {strides = array<i32>} : memref<64x64xf32, #tpu.memory_space<vmem>>, vector<64x64xf32>,
    %c0_33 = arith.constant 0 : index
    %c32_34 = arith.constant 32 : index
    %31 = vector.load %arg13[%c0_33, %c32_34] : memref<64x64xf32, #tpu.memory_space<vmem>>, vector<8x32xf32>
    %c56_35 = arith.constant 56 : index
    %c32_36 = arith.constant 32 : index
    %32 = vector.load %arg13[%c56_35, %c32_36] : memref<64x64xf32, #tpu.memory_space<vmem>>, vector<8x32xf32>
    %c0_37 = arith.constant 0 : index
    %c32_38 = arith.constant 32 : index
    %33 = vector.load %arg13[%c0_37, %c32_38] : memref<64x64xf32, #tpu.memory_space<vmem>>, vector<8x32xf32>
    tpu.vector_store %arg13[%c0_37, %c32_38], %32 {strides = array<i32>} : memref<64x64xf32, #tpu.memory_space<vmem>>, vector<8x32xf32>,
    %c56_39 = arith.constant 56 : index
    %c32_40 = arith.constant 32 : index
    %34 = vector.load %arg13[%c56_39, %c32_40] : memref<64x64xf32, #tpu.memory_space<vmem>>, vector<8x32xf32>
    tpu.vector_store %arg13[%c56_39, %c32_40], %31 {strides = array<i32>} : memref<64x64xf32, #tpu.memory_space<vmem>>, vector<8x32xf32>,
    %c8_41 = arith.constant 8 : index
    %c32_42 = arith.constant 32 : index
    %35 = vector.load %arg13[%c8_41, %c32_42] : memref<64x64xf32, #tpu.memory_space<vmem>>, vector<8x32xf32>
    %c48_43 = arith.constant 48 : index
    %c32_44 = arith.constant 32 : index
    %36 = vector.load %arg13[%c48_43, %c32_44] : memref<64x64xf32, #tpu.memory_space<vmem>>, vector<8x32xf32>
    %c8_45 = arith.constant 8 : index
    %c32_46 = arith.constant 32 : index
    %37 = vector.load %arg13[%c8_45, %c32_46] : memref<64x64xf32, #tpu.memory_space<vmem>>, vector<8x32xf32>
    tpu.vector_store %arg13[%c8_45, %c32_46], %36 {strides = array<i32>} : memref<64x64xf32, #tpu.memory_space<vmem>>, vector<8x32xf32>,
    %c48_47 = arith.constant 48 : index
    %c32_48 = arith.constant 32 : index
    %38 = vector.load %arg13[%c48_47, %c32_48] : memref<64x64xf32, #tpu.memory_space<vmem>>, vector<8x32xf32>
    tpu.vector_store %arg13[%c48_47, %c32_48], %35 {strides = array<i32>} : memref<64x64xf32, #tpu.memory_space<vmem>>, vector<8x32xf32>,
    %c16_49 = arith.constant 16 : index
    %c32_50 = arith.constant 32 : index
    %39 = vector.load %arg13[%c16_49, %c32_50] : memref<64x64xf32, #tpu.memory_space<vmem>>, vector<8x32xf32>
    %c40_51 = arith.constant 40 : index
    %c32_52 = arith.constant 32 : index
    %40 = vector.load %arg13[%c40_51, %c32_52] : memref<64x64xf32, #tpu.memory_space<vmem>>, vector<8x32xf32>
    %c16_53 = arith.constant 16 : index
    %c32_54 = arith.constant 32 : index
    %41 = vector.load %arg13[%c16_53, %c32_54] : memref<64x64xf32, #tpu.memory_space<vmem>>, vector<8x32xf32>
    tpu.vector_store %arg13[%c16_53, %c32_54], %40 {strides = array<i32>} : memref<64x64xf32, #tpu.memory_space<vmem>>, vector<8x32xf32>,
    %c40_55 = arith.constant 40 : index
    %c32_56 = arith.constant 32 : index
    %42 = vector.load %arg13[%c40_55, %c32_56] : memref<64x64xf32, #tpu.memory_space<vmem>>, vector<8x32xf32>
    tpu.vector_store %arg13[%c40_55, %c32_56], %39 {strides = array<i32>} : memref<64x64xf32, #tpu.memory_space<vmem>>, vector<8x32xf32>,
    %c24_57 = arith.constant 24 : index
    %c32_58 = arith.constant 32 : index
    %43 = vector.load %arg13[%c24_57, %c32_58] : memref<64x64xf32, #tpu.memory_space<vmem>>, vector<8x32xf32>
    %c32_59 = arith.constant 32 : index
    %c32_60 = arith.constant 32 : index
    %44 = vector.load %arg13[%c32_59, %c32_60] : memref<64x64xf32, #tpu.memory_space<vmem>>, vector<8x32xf32>
    %c24_61 = arith.constant 24 : index
    %c32_62 = arith.constant 32 : index
    %45 = vector.load %arg13[%c24_61, %c32_62] : memref<64x64xf32, #tpu.memory_space<vmem>>, vector<8x32xf32>
    tpu.vector_store %arg13[%c24_61, %c32_62], %44 {strides = array<i32>} : memref<64x64xf32, #tpu.memory_space<vmem>>, vector<8x32xf32>,
    %c32_63 = arith.constant 32 : index
    %c32_64 = arith.constant 32 : index
    %46 = vector.load %arg13[%c32_63, %c32_64] : memref<64x64xf32, #tpu.memory_space<vmem>>, vector<8x32xf32>
    tpu.vector_store %arg13[%c32_63, %c32_64], %43 {strides = array<i32>} : memref<64x64xf32, #tpu.memory_space<vmem>>, vector<8x32xf32>,
    %c0_65 = arith.constant 0 : index
    %c0_66 = arith.constant 0 : index
    %47 = vector.load %arg2[%c0_65, %c0_66] : memref<64x64xf32, #tpu.memory_space<vmem>>, vector<64x64xf32>
    %cst_67 = arith.constant 0.000000e+00 : f32
    %48 = vector.broadcast %cst_67 : f32 to vector<8x64xf32>
    %c0_i32 = arith.constant 0 : i32
    %c8_i32 = arith.constant 8 : i32
    %49 = arith.muli %c0_i32, %c8_i32 : i32
    %c7_i32 = arith.constant 7 : i32
    %50 = arith.subi %c7_i32, %c0_i32 : i32
    %c8_i32_68 = arith.constant 8 : i32
    %51 = arith.muli %50, %c8_i32_68 : i32
    %52 = arith.index_cast %49 : i32 to index
    %c0_69 = arith.constant 0 : index
    %53 = vector.load %arg13[%52, %c0_69] : memref<64x64xf32, #tpu.memory_space<vmem>>, vector<8x64xf32>
    %cst_70 = arith.constant dense<0.000000e+00> : vector<8x64xf32>
    %54 = tpu.matmul %48, %47, %cst_70 {dimension_numbers = #tpu.dot_dimension_numbers<[1], [0], [0], [1], [0, 0, 1, 1], [], []>} : vector<8x64xf32>, vector<64x64xf32>, vector<8x64xf32> -> vector<8x64xf32>
    %55 = arith.addf %53, %54 : vector<8x64xf32>
    %56 = math.tanh %55 : vector<8x64xf32>
    %57 = vector.extract_strided_slice %56 {offsets = [0, 0], sizes = [8, 32], strides = [1, 1]} : vector<8x64xf32> to vector<8x32xf32>
    %58 = arith.index_cast %49 : i32 to index
    %c0_71 = arith.constant 0 : index
    %59 = vector.load %arg14[%58, %c0_71] : memref<64x64xf32, #tpu.memory_space<vmem>>, vector<8x32xf32>
    tpu.vector_store %arg14[%58, %c0_71], %57 {strides = array<i32>} : memref<64x64xf32, #tpu.memory_space<vmem>>, vector<8x32xf32>,
    %60 = vector.extract_strided_slice %56 {offsets = [0, 32], sizes = [8, 32], strides = [1, 1]} : vector<8x64xf32> to vector<8x32xf32>
    %61 = arith.index_cast %51 : i32 to index
    %c32_72 = arith.constant 32 : index
    %62 = vector.load %arg14[%61, %c32_72] : memref<64x64xf32, #tpu.memory_space<vmem>>, vector<8x32xf32>
    tpu.vector_store %arg14[%61, %c32_72], %60 {strides = array<i32>} : memref<64x64xf32, #tpu.memory_space<vmem>>, vector<8x32xf32>,
    %c1_i32 = arith.constant 1 : i32
    %c8_i32_73 = arith.constant 8 : i32
    %63 = arith.muli %c1_i32, %c8_i32_73 : i32
    %c7_i32_74 = arith.constant 7 : i32
    %64 = arith.subi %c7_i32_74, %c1_i32 : i32
    %c8_i32_75 = arith.constant 8 : i32
    %65 = arith.muli %64, %c8_i32_75 : i32
    %66 = arith.index_cast %63 : i32 to index
    %c0_76 = arith.constant 0 : index
    %67 = vector.load %arg13[%66, %c0_76] : memref<64x64xf32, #tpu.memory_space<vmem>>, vector<8x64xf32>
    %cst_77 = arith.constant dense<0.000000e+00> : vector<8x64xf32>
    %68 = tpu.matmul %56, %47, %cst_77 {dimension_numbers = #tpu.dot_dimension_numbers<[1], [0], [0], [1], [0, 0, 1, 1], [], []>} : vector<8x64xf32>, vector<64x64xf32>, vector<8x64xf32> -> vector<8x64xf32>
    %69 = arith.addf %67, %68 : vector<8x64xf32>
    %70 = math.tanh %69 : vector<8x64xf32>
    %71 = vector.extract_strided_slice %70 {offsets = [0, 0], sizes = [8, 32], strides = [1, 1]} : vector<8x64xf32> to vector<8x32xf32>
    %72 = arith.index_cast %63 : i32 to index
    %c0_78 = arith.constant 0 : index
    %73 = vector.load %arg14[%72, %c0_78] : memref<64x64xf32, #tpu.memory_space<vmem>>, vector<8x32xf32>
    tpu.vector_store %arg14[%72, %c0_78], %71 {strides = array<i32>} : memref<64x64xf32, #tpu.memory_space<vmem>>, vector<8x32xf32>,
    %74 = vector.extract_strided_slice %70 {offsets = [0, 32], sizes = [8, 32], strides = [1, 1]} : vector<8x64xf32> to vector<8x32xf32>
    %75 = arith.index_cast %65 : i32 to index
    %c32_79 = arith.constant 32 : index
    %76 = vector.load %arg14[%75, %c32_79] : memref<64x64xf32, #tpu.memory_space<vmem>>, vector<8x32xf32>
    tpu.vector_store %arg14[%75, %c32_79], %74 {strides = array<i32>} : memref<64x64xf32, #tpu.memory_space<vmem>>, vector<8x32xf32>,
    %c2_i32 = arith.constant 2 : i32
    %c8_i32_80 = arith.constant 8 : i32
    %77 = arith.muli %c2_i32, %c8_i32_80 : i32
    %c7_i32_81 = arith.constant 7 : i32
    %78 = arith.subi %c7_i32_81, %c2_i32 : i32
    %c8_i32_82 = arith.constant 8 : i32
    %79 = arith.muli %78, %c8_i32_82 : i32
    %80 = arith.index_cast %77 : i32 to index
    %c0_83 = arith.constant 0 : index
    %81 = vector.load %arg13[%80, %c0_83] : memref<64x64xf32, #tpu.memory_space<vmem>>, vector<8x64xf32>
    %cst_84 = arith.constant dense<0.000000e+00> : vector<8x64xf32>
    %82 = tpu.matmul %70, %47, %cst_84 {dimension_numbers = #tpu.dot_dimension_numbers<[1], [0], [0], [1], [0, 0, 1, 1], [], []>} : vector<8x64xf32>, vector<64x64xf32>, vector<8x64xf32> -> vector<8x64xf32>
    %83 = arith.addf %81, %82 : vector<8x64xf32>
    %84 = math.tanh %83 : vector<8x64xf32>
    %85 = vector.extract_strided_slice %84 {offsets = [0, 0], sizes = [8, 32], strides = [1, 1]} : vector<8x64xf32> to vector<8x32xf32>
    %86 = arith.index_cast %77 : i32 to index
    %c0_85 = arith.constant 0 : index
    %87 = vector.load %arg14[%86, %c0_85] : memref<64x64xf32, #tpu.memory_space<vmem>>, vector<8x32xf32>
    tpu.vector_store %arg14[%86, %c0_85], %85 {strides = array<i32>} : memref<64x64xf32, #tpu.memory_space<vmem>>, vector<8x32xf32>,
    %88 = vector.extract_strided_slice %84 {offsets = [0, 32], sizes = [8, 32], strides = [1, 1]} : vector<8x64xf32> to vector<8x32xf32>
    %89 = arith.index_cast %79 : i32 to index
    %c32_86 = arith.constant 32 : index
    %90 = vector.load %arg14[%89, %c32_86] : memref<64x64xf32, #tpu.memory_space<vmem>>, vector<8x32xf32>
    tpu.vector_store %arg14[%89, %c32_86], %88 {strides = array<i32>} : memref<64x64xf32, #tpu.memory_space<vmem>>, vector<8x32xf32>,
    %c3_i32 = arith.constant 3 : i32
    %c8_i32_87 = arith.constant 8 : i32
    %91 = arith.muli %c3_i32, %c8_i32_87 : i32
    %c7_i32_88 = arith.constant 7 : i32
    %92 = arith.subi %c7_i32_88, %c3_i32 : i32
    %c8_i32_89 = arith.constant 8 : i32
    %93 = arith.muli %92, %c8_i32_89 : i32
    %94 = arith.index_cast %91 : i32 to index
    %c0_90 = arith.constant 0 : index
    %95 = vector.load %arg13[%94, %c0_90] : memref<64x64xf32, #tpu.memory_space<vmem>>, vector<8x64xf32>
    %cst_91 = arith.constant dense<0.000000e+00> : vector<8x64xf32>
    %96 = tpu.matmul %84, %47, %cst_91 {dimension_numbers = #tpu.dot_dimension_numbers<[1], [0], [0], [1], [0, 0, 1, 1], [], []>} : vector<8x64xf32>, vector<64x64xf32>, vector<8x64xf32> -> vector<8x64xf32>
    %97 = arith.addf %95, %96 : vector<8x64xf32>
    %98 = math.tanh %97 : vector<8x64xf32>
    %99 = vector.extract_strided_slice %98 {offsets = [0, 0], sizes = [8, 32], strides = [1, 1]} : vector<8x64xf32> to vector<8x32xf32>
    %100 = arith.index_cast %91 : i32 to index
    %c0_92 = arith.constant 0 : index
    %101 = vector.load %arg14[%100, %c0_92] : memref<64x64xf32, #tpu.memory_space<vmem>>, vector<8x32xf32>
    tpu.vector_store %arg14[%100, %c0_92], %99 {strides = array<i32>} : memref<64x64xf32, #tpu.memory_space<vmem>>, vector<8x32xf32>,
    %102 = vector.extract_strided_slice %98 {offsets = [0, 32], sizes = [8, 32], strides = [1, 1]} : vector<8x64xf32> to vector<8x32xf32>
    %103 = arith.index_cast %93 : i32 to index
    %c32_93 = arith.constant 32 : index
    %104 = vector.load %arg14[%103, %c32_93] : memref<64x64xf32, #tpu.memory_space<vmem>>, vector<8x32xf32>
    tpu.vector_store %arg14[%103, %c32_93], %102 {strides = array<i32>} : memref<64x64xf32, #tpu.memory_space<vmem>>, vector<8x32xf32>,
    %c4_i32 = arith.constant 4 : i32
    %c8_i32_94 = arith.constant 8 : i32
    %105 = arith.muli %c4_i32, %c8_i32_94 : i32
    %c7_i32_95 = arith.constant 7 : i32
    %106 = arith.subi %c7_i32_95, %c4_i32 : i32
    %c8_i32_96 = arith.constant 8 : i32
    %107 = arith.muli %106, %c8_i32_96 : i32
    %108 = arith.index_cast %105 : i32 to index
    %c0_97 = arith.constant 0 : index
    %109 = vector.load %arg13[%108, %c0_97] : memref<64x64xf32, #tpu.memory_space<vmem>>, vector<8x64xf32>
    %cst_98 = arith.constant dense<0.000000e+00> : vector<8x64xf32>
    %110 = tpu.matmul %98, %47, %cst_98 {dimension_numbers = #tpu.dot_dimension_numbers<[1], [0], [0], [1], [0, 0, 1, 1], [], []>} : vector<8x64xf32>, vector<64x64xf32>, vector<8x64xf32> -> vector<8x64xf32>
    %111 = arith.addf %109, %110 : vector<8x64xf32>
    %112 = math.tanh %111 : vector<8x64xf32>
    %113 = vector.extract_strided_slice %112 {offsets = [0, 0], sizes = [8, 32], strides = [1, 1]} : vector<8x64xf32> to vector<8x32xf32>
    %114 = arith.index_cast %105 : i32 to index
    %c0_99 = arith.constant 0 : index
    %115 = vector.load %arg14[%114, %c0_99] : memref<64x64xf32, #tpu.memory_space<vmem>>, vector<8x32xf32>
    tpu.vector_store %arg14[%114, %c0_99], %113 {strides = array<i32>} : memref<64x64xf32, #tpu.memory_space<vmem>>, vector<8x32xf32>,
    %116 = vector.extract_strided_slice %112 {offsets = [0, 32], sizes = [8, 32], strides = [1, 1]} : vector<8x64xf32> to vector<8x32xf32>
    %117 = arith.index_cast %107 : i32 to index
    %c32_100 = arith.constant 32 : index
    %118 = vector.load %arg14[%117, %c32_100] : memref<64x64xf32, #tpu.memory_space<vmem>>, vector<8x32xf32>
    tpu.vector_store %arg14[%117, %c32_100], %116 {strides = array<i32>} : memref<64x64xf32, #tpu.memory_space<vmem>>, vector<8x32xf32>,
    %c5_i32 = arith.constant 5 : i32
    %c8_i32_101 = arith.constant 8 : i32
    %119 = arith.muli %c5_i32, %c8_i32_101 : i32
    %c7_i32_102 = arith.constant 7 : i32
    %120 = arith.subi %c7_i32_102, %c5_i32 : i32
    %c8_i32_103 = arith.constant 8 : i32
    %121 = arith.muli %120, %c8_i32_103 : i32
    %122 = arith.index_cast %119 : i32 to index
    %c0_104 = arith.constant 0 : index
    %123 = vector.load %arg13[%122, %c0_104] : memref<64x64xf32, #tpu.memory_space<vmem>>, vector<8x64xf32>
    %cst_105 = arith.constant dense<0.000000e+00> : vector<8x64xf32>
    %124 = tpu.matmul %112, %47, %cst_105 {dimension_numbers = #tpu.dot_dimension_numbers<[1], [0], [0], [1], [0, 0, 1, 1], [], []>} : vector<8x64xf32>, vector<64x64xf32>, vector<8x64xf32> -> vector<8x64xf32>
    %125 = arith.addf %123, %124 : vector<8x64xf32>
    %126 = math.tanh %125 : vector<8x64xf32>
    %127 = vector.extract_strided_slice %126 {offsets = [0, 0], sizes = [8, 32], strides = [1, 1]} : vector<8x64xf32> to vector<8x32xf32>
    %128 = arith.index_cast %119 : i32 to index
    %c0_106 = arith.constant 0 : index
    %129 = vector.load %arg14[%128, %c0_106] : memref<64x64xf32, #tpu.memory_space<vmem>>, vector<8x32xf32>
    tpu.vector_store %arg14[%128, %c0_106], %127 {strides = array<i32>} : memref<64x64xf32, #tpu.memory_space<vmem>>, vector<8x32xf32>,
    %130 = vector.extract_strided_slice %126 {offsets = [0, 32], sizes = [8, 32], strides = [1, 1]} : vector<8x64xf32> to vector<8x32xf32>
    %131 = arith.index_cast %121 : i32 to index
    %c32_107 = arith.constant 32 : index
    %132 = vector.load %arg14[%131, %c32_107] : memref<64x64xf32, #tpu.memory_space<vmem>>, vector<8x32xf32>
    tpu.vector_store %arg14[%131, %c32_107], %130 {strides = array<i32>} : memref<64x64xf32, #tpu.memory_space<vmem>>, vector<8x32xf32>,
    %c6_i32 = arith.constant 6 : i32
    %c8_i32_108 = arith.constant 8 : i32
    %133 = arith.muli %c6_i32, %c8_i32_108 : i32
    %c7_i32_109 = arith.constant 7 : i32
    %134 = arith.subi %c7_i32_109, %c6_i32 : i32
    %c8_i32_110 = arith.constant 8 : i32
    %135 = arith.muli %134, %c8_i32_110 : i32
    %136 = arith.index_cast %133 : i32 to index
    %c0_111 = arith.constant 0 : index
    %137 = vector.load %arg13[%136, %c0_111] : memref<64x64xf32, #tpu.memory_space<vmem>>, vector<8x64xf32>
    %cst_112 = arith.constant dense<0.000000e+00> : vector<8x64xf32>
    %138 = tpu.matmul %126, %47, %cst_112 {dimension_numbers = #tpu.dot_dimension_numbers<[1], [0], [0], [1], [0, 0, 1, 1], [], []>} : vector<8x64xf32>, vector<64x64xf32>, vector<8x64xf32> -> vector<8x64xf32>
    %139 = arith.addf %137, %138 : vector<8x64xf32>
    %140 = math.tanh %139 : vector<8x64xf32>
    %141 = vector.extract_strided_slice %140 {offsets = [0, 0], sizes = [8, 32], strides = [1, 1]} : vector<8x64xf32> to vector<8x32xf32>
    %142 = arith.index_cast %133 : i32 to index
    %c0_113 = arith.constant 0 : index
    %143 = vector.load %arg14[%142, %c0_113] : memref<64x64xf32, #tpu.memory_space<vmem>>, vector<8x32xf32>
    tpu.vector_store %arg14[%142, %c0_113], %141 {strides = array<i32>} : memref<64x64xf32, #tpu.memory_space<vmem>>, vector<8x32xf32>,
    %144 = vector.extract_strided_slice %140 {offsets = [0, 32], sizes = [8, 32], strides = [1, 1]} : vector<8x64xf32> to vector<8x32xf32>
    %145 = arith.index_cast %135 : i32 to index
    %c32_114 = arith.constant 32 : index
    %146 = vector.load %arg14[%145, %c32_114] : memref<64x64xf32, #tpu.memory_space<vmem>>, vector<8x32xf32>
    tpu.vector_store %arg14[%145, %c32_114], %144 {strides = array<i32>} : memref<64x64xf32, #tpu.memory_space<vmem>>, vector<8x32xf32>,
    %c7_i32_115 = arith.constant 7 : i32
    %c8_i32_116 = arith.constant 8 : i32
    %147 = arith.muli %c7_i32_115, %c8_i32_116 : i32
    %c7_i32_117 = arith.constant 7 : i32
    %148 = arith.subi %c7_i32_117, %c7_i32_115 : i32
    %c8_i32_118 = arith.constant 8 : i32
    %149 = arith.muli %148, %c8_i32_118 : i32
    %150 = arith.index_cast %147 : i32 to index
    %c0_119 = arith.constant 0 : index
    %151 = vector.load %arg13[%150, %c0_119] : memref<64x64xf32, #tpu.memory_space<vmem>>, vector<8x64xf32>
    %cst_120 = arith.constant dense<0.000000e+00> : vector<8x64xf32>
    %152 = tpu.matmul %140, %47, %cst_120 {dimension_numbers = #tpu.dot_dimension_numbers<[1], [0], [0], [1], [0, 0, 1, 1], [], []>} : vector<8x64xf32>, vector<64x64xf32>, vector<8x64xf32> -> vector<8x64xf32>
    %153 = arith.addf %151, %152 : vector<8x64xf32>
    %154 = math.tanh %153 : vector<8x64xf32>
    %155 = vector.extract_strided_slice %154 {offsets = [0, 0], sizes = [8, 32], strides = [1, 1]} : vector<8x64xf32> to vector<8x32xf32>
    %156 = arith.index_cast %147 : i32 to index
    %c0_121 = arith.constant 0 : index
    %157 = vector.load %arg14[%156, %c0_121] : memref<64x64xf32, #tpu.memory_space<vmem>>, vector<8x32xf32>
    tpu.vector_store %arg14[%156, %c0_121], %155 {strides = array<i32>} : memref<64x64xf32, #tpu.memory_space<vmem>>, vector<8x32xf32>,
    %158 = vector.extract_strided_slice %154 {offsets = [0, 32], sizes = [8, 32], strides = [1, 1]} : vector<8x64xf32> to vector<8x32xf32>
    %159 = arith.index_cast %149 : i32 to index
    %c32_122 = arith.constant 32 : index
    %160 = vector.load %arg14[%159, %c32_122] : memref<64x64xf32, #tpu.memory_space<vmem>>, vector<8x32xf32>
    tpu.vector_store %arg14[%159, %c32_122], %158 {strides = array<i32>} : memref<64x64xf32, #tpu.memory_space<vmem>>, vector<8x32xf32>,
    %c8_i32_123 = arith.constant 8 : i32
    %c0_124 = arith.constant 0 : index
    %c0_125 = arith.constant 0 : index
    %161 = vector.load %arg14[%c0_124, %c0_125] : memref<64x64xf32, #tpu.memory_space<vmem>>, vector<64x64xf32>
    %c0_126 = arith.constant 0 : index
    %c0_127 = arith.constant 0 : index
    %162 = vector.load %arg4[%c0_126, %c0_127] : memref<64x64xf32, #tpu.memory_space<vmem>>, vector<64x64xf32>
    %cst_128 = arith.constant dense<0.000000e+00> : vector<64x64xf32>
    %163 = tpu.matmul %161, %162, %cst_128 {dimension_numbers = #tpu.dot_dimension_numbers<[1], [0], [0], [1], [0, 0, 1, 1], [], []>} : vector<64x64xf32>, vector<64x64xf32>, vector<64x64xf32> -> vector<64x64xf32>
    %c0_129 = arith.constant 0 : index
    %c0_130 = arith.constant 0 : index
    %164 = vector.load %arg6[%c0_129, %c0_130] : memref<1x64xf32, #tpu.memory_space<vmem>>, vector<1x64xf32>
    %165 = vector.broadcast %164 : vector<1x64xf32> to vector<64x64xf32>
    %166 = arith.addf %163, %165 : vector<64x64xf32>
    %c0_131 = arith.constant 0 : index
    %c0_132 = arith.constant 0 : index
    %167 = vector.load %arg13[%c0_131, %c0_132] : memref<64x64xf32, #tpu.memory_space<vmem>>, vector<64x64xf32>
    tpu.vector_store %arg13[%c0_131, %c0_132], %166 {strides = array<i32>} : memref<64x64xf32, #tpu.memory_space<vmem>>, vector<64x64xf32>,
    %c0_133 = arith.constant 0 : index
    %c32_134 = arith.constant 32 : index
    %168 = vector.load %arg13[%c0_133, %c32_134] : memref<64x64xf32, #tpu.memory_space<vmem>>, vector<8x32xf32>
    %c56_135 = arith.constant 56 : index
    %c32_136 = arith.constant 32 : index
    %169 = vector.load %arg13[%c56_135, %c32_136] : memref<64x64xf32, #tpu.memory_space<vmem>>, vector<8x32xf32>
    %c0_137 = arith.constant 0 : index
    %c32_138 = arith.constant 32 : index
    %170 = vector.load %arg13[%c0_137, %c32_138] : memref<64x64xf32, #tpu.memory_space<vmem>>, vector<8x32xf32>
    tpu.vector_store %arg13[%c0_137, %c32_138], %169 {strides = array<i32>} : memref<64x64xf32, #tpu.memory_space<vmem>>, vector<8x32xf32>,
    %c56_139 = arith.constant 56 : index
    %c32_140 = arith.constant 32 : index
    %171 = vector.load %arg13[%c56_139, %c32_140] : memref<64x64xf32, #tpu.memory_space<vmem>>, vector<8x32xf32>
    tpu.vector_store %arg13[%c56_139, %c32_140], %168 {strides = array<i32>} : memref<64x64xf32, #tpu.memory_space<vmem>>, vector<8x32xf32>,
    %c8_141 = arith.constant 8 : index
    %c32_142 = arith.constant 32 : index
    %172 = vector.load %arg13[%c8_141, %c32_142] : memref<64x64xf32, #tpu.memory_space<vmem>>, vector<8x32xf32>
    %c48_143 = arith.constant 48 : index
    %c32_144 = arith.constant 32 : index
    %173 = vector.load %arg13[%c48_143, %c32_144] : memref<64x64xf32, #tpu.memory_space<vmem>>, vector<8x32xf32>
    %c8_145 = arith.constant 8 : index
    %c32_146 = arith.constant 32 : index
    %174 = vector.load %arg13[%c8_145, %c32_146] : memref<64x64xf32, #tpu.memory_space<vmem>>, vector<8x32xf32>
    tpu.vector_store %arg13[%c8_145, %c32_146], %173 {strides = array<i32>} : memref<64x64xf32, #tpu.memory_space<vmem>>, vector<8x32xf32>,
    %c48_147 = arith.constant 48 : index
    %c32_148 = arith.constant 32 : index
    %175 = vector.load %arg13[%c48_147, %c32_148] : memref<64x64xf32, #tpu.memory_space<vmem>>, vector<8x32xf32>
    tpu.vector_store %arg13[%c48_147, %c32_148], %172 {strides = array<i32>} : memref<64x64xf32, #tpu.memory_space<vmem>>, vector<8x32xf32>,
    %c16_149 = arith.constant 16 : index
    %c32_150 = arith.constant 32 : index
    %176 = vector.load %arg13[%c16_149, %c32_150] : memref<64x64xf32, #tpu.memory_space<vmem>>, vector<8x32xf32>
    %c40_151 = arith.constant 40 : index
    %c32_152 = arith.constant 32 : index
    %177 = vector.load %arg13[%c40_151, %c32_152] : memref<64x64xf32, #tpu.memory_space<vmem>>, vector<8x32xf32>
    %c16_153 = arith.constant 16 : index
    %c32_154 = arith.constant 32 : index
    %178 = vector.load %arg13[%c16_153, %c32_154] : memref<64x64xf32, #tpu.memory_space<vmem>>, vector<8x32xf32>
    tpu.vector_store %arg13[%c16_153, %c32_154], %177 {strides = array<i32>} : memref<64x64xf32, #tpu.memory_space<vmem>>, vector<8x32xf32>,
    %c40_155 = arith.constant 40 : index
    %c32_156 = arith.constant 32 : index
    %179 = vector.load %arg13[%c40_155, %c32_156] : memref<64x64xf32, #tpu.memory_space<vmem>>, vector<8x32xf32>
    tpu.vector_store %arg13[%c40_155, %c32_156], %176 {strides = array<i32>} : memref<64x64xf32, #tpu.memory_space<vmem>>, vector<8x32xf32>,
    %c24_157 = arith.constant 24 : index
    %c32_158 = arith.constant 32 : index
    %180 = vector.load %arg13[%c24_157, %c32_158] : memref<64x64xf32, #tpu.memory_space<vmem>>, vector<8x32xf32>
    %c32_159 = arith.constant 32 : index
    %c32_160 = arith.constant 32 : index
    %181 = vector.load %arg13[%c32_159, %c32_160] : memref<64x64xf32, #tpu.memory_space<vmem>>, vector<8x32xf32>
    %c24_161 = arith.constant 24 : index
    %c32_162 = arith.constant 32 : index
    %182 = vector.load %arg13[%c24_161, %c32_162] : memref<64x64xf32, #tpu.memory_space<vmem>>, vector<8x32xf32>
    tpu.vector_store %arg13[%c24_161, %c32_162], %181 {strides = array<i32>} : memref<64x64xf32, #tpu.memory_space<vmem>>, vector<8x32xf32>,
    %c32_163 = arith.constant 32 : index
    %c32_164 = arith.constant 32 : index
    %183 = vector.load %arg13[%c32_163, %c32_164] : memref<64x64xf32, #tpu.memory_space<vmem>>, vector<8x32xf32>
    tpu.vector_store %arg13[%c32_163, %c32_164], %180 {strides = array<i32>} : memref<64x64xf32, #tpu.memory_space<vmem>>, vector<8x32xf32>,
    %c0_165 = arith.constant 0 : index
    %c0_166 = arith.constant 0 : index
    %184 = vector.load %arg5[%c0_165, %c0_166] : memref<64x64xf32, #tpu.memory_space<vmem>>, vector<64x64xf32>
    %cst_167 = arith.constant 0.000000e+00 : f32
    %185 = vector.broadcast %cst_167 : f32 to vector<8x64xf32>
    %c0_i32_168 = arith.constant 0 : i32
    %c8_i32_169 = arith.constant 8 : i32
    %186 = arith.muli %c0_i32_168, %c8_i32_169 : i32
    %c7_i32_170 = arith.constant 7 : i32
    %187 = arith.subi %c7_i32_170, %c0_i32_168 : i32
    %c8_i32_171 = arith.constant 8 : i32
    %188 = arith.muli %187, %c8_i32_171 : i32
    %189 = arith.index_cast %186 : i32 to index
    %c0_172 = arith.constant 0 : index
    %190 = vector.load %arg13[%189, %c0_172] : memref<64x64xf32, #tpu.memory_space<vmem>>, vector<8x64xf32>
    %cst_173 = arith.constant dense<0.000000e+00> : vector<8x64xf32>
    %191 = tpu.matmul %185, %184, %cst_173 {dimension_numbers = #tpu.dot_dimension_numbers<[1], [0], [0], [1], [0, 0, 1, 1], [], []>} : vector<8x64xf32>, vector<64x64xf32>, vector<8x64xf32> -> vector<8x64xf32>
    %192 = arith.addf %190, %191 : vector<8x64xf32>
    %193 = math.tanh %192 : vector<8x64xf32>
    %194 = vector.extract_strided_slice %193 {offsets = [0, 0], sizes = [8, 32], strides = [1, 1]} : vector<8x64xf32> to vector<8x32xf32>
    %195 = arith.index_cast %186 : i32 to index
    %c0_174 = arith.constant 0 : index
    %196 = vector.load %arg14[%195, %c0_174] : memref<64x64xf32, #tpu.memory_space<vmem>>, vector<8x32xf32>
    tpu.vector_store %arg14[%195, %c0_174], %194 {strides = array<i32>} : memref<64x64xf32, #tpu.memory_space<vmem>>, vector<8x32xf32>,
    %197 = vector.extract_strided_slice %193 {offsets = [0, 32], sizes = [8, 32], strides = [1, 1]} : vector<8x64xf32> to vector<8x32xf32>
    %198 = arith.index_cast %188 : i32 to index
    %c32_175 = arith.constant 32 : index
    %199 = vector.load %arg14[%198, %c32_175] : memref<64x64xf32, #tpu.memory_space<vmem>>, vector<8x32xf32>
    tpu.vector_store %arg14[%198, %c32_175], %197 {strides = array<i32>} : memref<64x64xf32, #tpu.memory_space<vmem>>, vector<8x32xf32>,
    %c1_i32_176 = arith.constant 1 : i32
    %c8_i32_177 = arith.constant 8 : i32
    %200 = arith.muli %c1_i32_176, %c8_i32_177 : i32
    %c7_i32_178 = arith.constant 7 : i32
    %201 = arith.subi %c7_i32_178, %c1_i32_176 : i32
    %c8_i32_179 = arith.constant 8 : i32
    %202 = arith.muli %201, %c8_i32_179 : i32
    %203 = arith.index_cast %200 : i32 to index
    %c0_180 = arith.constant 0 : index
    %204 = vector.load %arg13[%203, %c0_180] : memref<64x64xf32, #tpu.memory_space<vmem>>, vector<8x64xf32>
    %cst_181 = arith.constant dense<0.000000e+00> : vector<8x64xf32>
    %205 = tpu.matmul %193, %184, %cst_181 {dimension_numbers = #tpu.dot_dimension_numbers<[1], [0], [0], [1], [0, 0, 1, 1], [], []>} : vector<8x64xf32>, vector<64x64xf32>, vector<8x64xf32> -> vector<8x64xf32>
    %206 = arith.addf %204, %205 : vector<8x64xf32>
    %207 = math.tanh %206 : vector<8x64xf32>
    %208 = vector.extract_strided_slice %207 {offsets = [0, 0], sizes = [8, 32], strides = [1, 1]} : vector<8x64xf32> to vector<8x32xf32>
    %209 = arith.index_cast %200 : i32 to index
    %c0_182 = arith.constant 0 : index
    %210 = vector.load %arg14[%209, %c0_182] : memref<64x64xf32, #tpu.memory_space<vmem>>, vector<8x32xf32>
    tpu.vector_store %arg14[%209, %c0_182], %208 {strides = array<i32>} : memref<64x64xf32, #tpu.memory_space<vmem>>, vector<8x32xf32>,
    %211 = vector.extract_strided_slice %207 {offsets = [0, 32], sizes = [8, 32], strides = [1, 1]} : vector<8x64xf32> to vector<8x32xf32>
    %212 = arith.index_cast %202 : i32 to index
    %c32_183 = arith.constant 32 : index
    %213 = vector.load %arg14[%212, %c32_183] : memref<64x64xf32, #tpu.memory_space<vmem>>, vector<8x32xf32>
    tpu.vector_store %arg14[%212, %c32_183], %211 {strides = array<i32>} : memref<64x64xf32, #tpu.memory_space<vmem>>, vector<8x32xf32>,
    %c2_i32_184 = arith.constant 2 : i32
    %c8_i32_185 = arith.constant 8 : i32
    %214 = arith.muli %c2_i32_184, %c8_i32_185 : i32
    %c7_i32_186 = arith.constant 7 : i32
    %215 = arith.subi %c7_i32_186, %c2_i32_184 : i32
    %c8_i32_187 = arith.constant 8 : i32
    %216 = arith.muli %215, %c8_i32_187 : i32
    %217 = arith.index_cast %214 : i32 to index
    %c0_188 = arith.constant 0 : index
    %218 = vector.load %arg13[%217, %c0_188] : memref<64x64xf32, #tpu.memory_space<vmem>>, vector<8x64xf32>
    %cst_189 = arith.constant dense<0.000000e+00> : vector<8x64xf32>
    %219 = tpu.matmul %207, %184, %cst_189 {dimension_numbers = #tpu.dot_dimension_numbers<[1], [0], [0], [1], [0, 0, 1, 1], [], []>} : vector<8x64xf32>, vector<64x64xf32>, vector<8x64xf32> -> vector<8x64xf32>
    %220 = arith.addf %218, %219 : vector<8x64xf32>
    %221 = math.tanh %220 : vector<8x64xf32>
    %222 = vector.extract_strided_slice %221 {offsets = [0, 0], sizes = [8, 32], strides = [1, 1]} : vector<8x64xf32> to vector<8x32xf32>
    %223 = arith.index_cast %214 : i32 to index
    %c0_190 = arith.constant 0 : index
    %224 = vector.load %arg14[%223, %c0_190] : memref<64x64xf32, #tpu.memory_space<vmem>>, vector<8x32xf32>
    tpu.vector_store %arg14[%223, %c0_190], %222 {strides = array<i32>} : memref<64x64xf32, #tpu.memory_space<vmem>>, vector<8x32xf32>,
    %225 = vector.extract_strided_slice %221 {offsets = [0, 32], sizes = [8, 32], strides = [1, 1]} : vector<8x64xf32> to vector<8x32xf32>
    %226 = arith.index_cast %216 : i32 to index
    %c32_191 = arith.constant 32 : index
    %227 = vector.load %arg14[%226, %c32_191] : memref<64x64xf32, #tpu.memory_space<vmem>>, vector<8x32xf32>
    tpu.vector_store %arg14[%226, %c32_191], %225 {strides = array<i32>} : memref<64x64xf32, #tpu.memory_space<vmem>>, vector<8x32xf32>,
    %c3_i32_192 = arith.constant 3 : i32
    %c8_i32_193 = arith.constant 8 : i32
    %228 = arith.muli %c3_i32_192, %c8_i32_193 : i32
    %c7_i32_194 = arith.constant 7 : i32
    %229 = arith.subi %c7_i32_194, %c3_i32_192 : i32
    %c8_i32_195 = arith.constant 8 : i32
    %230 = arith.muli %229, %c8_i32_195 : i32
    %231 = arith.index_cast %228 : i32 to index
    %c0_196 = arith.constant 0 : index
    %232 = vector.load %arg13[%231, %c0_196] : memref<64x64xf32, #tpu.memory_space<vmem>>, vector<8x64xf32>
    %cst_197 = arith.constant dense<0.000000e+00> : vector<8x64xf32>
    %233 = tpu.matmul %221, %184, %cst_197 {dimension_numbers = #tpu.dot_dimension_numbers<[1], [0], [0], [1], [0, 0, 1, 1], [], []>} : vector<8x64xf32>, vector<64x64xf32>, vector<8x64xf32> -> vector<8x64xf32>
    %234 = arith.addf %232, %233 : vector<8x64xf32>
    %235 = math.tanh %234 : vector<8x64xf32>
    %236 = vector.extract_strided_slice %235 {offsets = [0, 0], sizes = [8, 32], strides = [1, 1]} : vector<8x64xf32> to vector<8x32xf32>
    %237 = arith.index_cast %228 : i32 to index
    %c0_198 = arith.constant 0 : index
    %238 = vector.load %arg14[%237, %c0_198] : memref<64x64xf32, #tpu.memory_space<vmem>>, vector<8x32xf32>
    tpu.vector_store %arg14[%237, %c0_198], %236 {strides = array<i32>} : memref<64x64xf32, #tpu.memory_space<vmem>>, vector<8x32xf32>,
    %239 = vector.extract_strided_slice %235 {offsets = [0, 32], sizes = [8, 32], strides = [1, 1]} : vector<8x64xf32> to vector<8x32xf32>
    %240 = arith.index_cast %230 : i32 to index
    %c32_199 = arith.constant 32 : index
    %241 = vector.load %arg14[%240, %c32_199] : memref<64x64xf32, #tpu.memory_space<vmem>>, vector<8x32xf32>
    tpu.vector_store %arg14[%240, %c32_199], %239 {strides = array<i32>} : memref<64x64xf32, #tpu.memory_space<vmem>>, vector<8x32xf32>,
    %c4_i32_200 = arith.constant 4 : i32
    %c8_i32_201 = arith.constant 8 : i32
    %242 = arith.muli %c4_i32_200, %c8_i32_201 : i32
    %c7_i32_202 = arith.constant 7 : i32
    %243 = arith.subi %c7_i32_202, %c4_i32_200 : i32
    %c8_i32_203 = arith.constant 8 : i32
    %244 = arith.muli %243, %c8_i32_203 : i32
    %245 = arith.index_cast %242 : i32 to index
    %c0_204 = arith.constant 0 : index
    %246 = vector.load %arg13[%245, %c0_204] : memref<64x64xf32, #tpu.memory_space<vmem>>, vector<8x64xf32>
    %cst_205 = arith.constant dense<0.000000e+00> : vector<8x64xf32>
    %247 = tpu.matmul %235, %184, %cst_205 {dimension_numbers = #tpu.dot_dimension_numbers<[1], [0], [0], [1], [0, 0, 1, 1], [], []>} : vector<8x64xf32>, vector<64x64xf32>, vector<8x64xf32> -> vector<8x64xf32>
    %248 = arith.addf %246, %247 : vector<8x64xf32>
    %249 = math.tanh %248 : vector<8x64xf32>
    %250 = vector.extract_strided_slice %249 {offsets = [0, 0], sizes = [8, 32], strides = [1, 1]} : vector<8x64xf32> to vector<8x32xf32>
    %251 = arith.index_cast %242 : i32 to index
    %c0_206 = arith.constant 0 : index
    %252 = vector.load %arg14[%251, %c0_206] : memref<64x64xf32, #tpu.memory_space<vmem>>, vector<8x32xf32>
    tpu.vector_store %arg14[%251, %c0_206], %250 {strides = array<i32>} : memref<64x64xf32, #tpu.memory_space<vmem>>, vector<8x32xf32>,
    %253 = vector.extract_strided_slice %249 {offsets = [0, 32], sizes = [8, 32], strides = [1, 1]} : vector<8x64xf32> to vector<8x32xf32>
    %254 = arith.index_cast %244 : i32 to index
    %c32_207 = arith.constant 32 : index
    %255 = vector.load %arg14[%254, %c32_207] : memref<64x64xf32, #tpu.memory_space<vmem>>, vector<8x32xf32>
    tpu.vector_store %arg14[%254, %c32_207], %253 {strides = array<i32>} : memref<64x64xf32, #tpu.memory_space<vmem>>, vector<8x32xf32>,
    %c5_i32_208 = arith.constant 5 : i32
    %c8_i32_209 = arith.constant 8 : i32
    %256 = arith.muli %c5_i32_208, %c8_i32_209 : i32
    %c7_i32_210 = arith.constant 7 : i32
    %257 = arith.subi %c7_i32_210, %c5_i32_208 : i32
    %c8_i32_211 = arith.constant 8 : i32
    %258 = arith.muli %257, %c8_i32_211 : i32
    %259 = arith.index_cast %256 : i32 to index
    %c0_212 = arith.constant 0 : index
    %260 = vector.load %arg13[%259, %c0_212] : memref<64x64xf32, #tpu.memory_space<vmem>>, vector<8x64xf32>
    %cst_213 = arith.constant dense<0.000000e+00> : vector<8x64xf32>
    %261 = tpu.matmul %249, %184, %cst_213 {dimension_numbers = #tpu.dot_dimension_numbers<[1], [0], [0], [1], [0, 0, 1, 1], [], []>} : vector<8x64xf32>, vector<64x64xf32>, vector<8x64xf32> -> vector<8x64xf32>
    %262 = arith.addf %260, %261 : vector<8x64xf32>
    %263 = math.tanh %262 : vector<8x64xf32>
    %264 = vector.extract_strided_slice %263 {offsets = [0, 0], sizes = [8, 32], strides = [1, 1]} : vector<8x64xf32> to vector<8x32xf32>
    %265 = arith.index_cast %256 : i32 to index
    %c0_214 = arith.constant 0 : index
    %266 = vector.load %arg14[%265, %c0_214] : memref<64x64xf32, #tpu.memory_space<vmem>>, vector<8x32xf32>
    tpu.vector_store %arg14[%265, %c0_214], %264 {strides = array<i32>} : memref<64x64xf32, #tpu.memory_space<vmem>>, vector<8x32xf32>,
    %267 = vector.extract_strided_slice %263 {offsets = [0, 32], sizes = [8, 32], strides = [1, 1]} : vector<8x64xf32> to vector<8x32xf32>
    %268 = arith.index_cast %258 : i32 to index
    %c32_215 = arith.constant 32 : index
    %269 = vector.load %arg14[%268, %c32_215] : memref<64x64xf32, #tpu.memory_space<vmem>>, vector<8x32xf32>
    tpu.vector_store %arg14[%268, %c32_215], %267 {strides = array<i32>} : memref<64x64xf32, #tpu.memory_space<vmem>>, vector<8x32xf32>,
    %c6_i32_216 = arith.constant 6 : i32
    %c8_i32_217 = arith.constant 8 : i32
    %270 = arith.muli %c6_i32_216, %c8_i32_217 : i32
    %c7_i32_218 = arith.constant 7 : i32
    %271 = arith.subi %c7_i32_218, %c6_i32_216 : i32
    %c8_i32_219 = arith.constant 8 : i32
    %272 = arith.muli %271, %c8_i32_219 : i32
    %273 = arith.index_cast %270 : i32 to index
    %c0_220 = arith.constant 0 : index
    %274 = vector.load %arg13[%273, %c0_220] : memref<64x64xf32, #tpu.memory_space<vmem>>, vector<8x64xf32>
    %cst_221 = arith.constant dense<0.000000e+00> : vector<8x64xf32>
    %275 = tpu.matmul %263, %184, %cst_221 {dimension_numbers = #tpu.dot_dimension_numbers<[1], [0], [0], [1], [0, 0, 1, 1], [], []>} : vector<8x64xf32>, vector<64x64xf32>, vector<8x64xf32> -> vector<8x64xf32>
    %276 = arith.addf %274, %275 : vector<8x64xf32>
    %277 = math.tanh %276 : vector<8x64xf32>
    %278 = vector.extract_strided_slice %277 {offsets = [0, 0], sizes = [8, 32], strides = [1, 1]} : vector<8x64xf32> to vector<8x32xf32>
    %279 = arith.index_cast %270 : i32 to index
    %c0_222 = arith.constant 0 : index
    %280 = vector.load %arg14[%279, %c0_222] : memref<64x64xf32, #tpu.memory_space<vmem>>, vector<8x32xf32>
    tpu.vector_store %arg14[%279, %c0_222], %278 {strides = array<i32>} : memref<64x64xf32, #tpu.memory_space<vmem>>, vector<8x32xf32>,
    %281 = vector.extract_strided_slice %277 {offsets = [0, 32], sizes = [8, 32], strides = [1, 1]} : vector<8x64xf32> to vector<8x32xf32>
    %282 = arith.index_cast %272 : i32 to index
    %c32_223 = arith.constant 32 : index
    %283 = vector.load %arg14[%282, %c32_223] : memref<64x64xf32, #tpu.memory_space<vmem>>, vector<8x32xf32>
    tpu.vector_store %arg14[%282, %c32_223], %281 {strides = array<i32>} : memref<64x64xf32, #tpu.memory_space<vmem>>, vector<8x32xf32>,
    %c7_i32_224 = arith.constant 7 : i32
    %c8_i32_225 = arith.constant 8 : i32
    %284 = arith.muli %c7_i32_224, %c8_i32_225 : i32
    %c7_i32_226 = arith.constant 7 : i32
    %285 = arith.subi %c7_i32_226, %c7_i32_224 : i32
    %c8_i32_227 = arith.constant 8 : i32
    %286 = arith.muli %285, %c8_i32_227 : i32
    %287 = arith.index_cast %284 : i32 to index
    %c0_228 = arith.constant 0 : index
    %288 = vector.load %arg13[%287, %c0_228] : memref<64x64xf32, #tpu.memory_space<vmem>>, vector<8x64xf32>
    %cst_229 = arith.constant dense<0.000000e+00> : vector<8x64xf32>
    %289 = tpu.matmul %277, %184, %cst_229 {dimension_numbers = #tpu.dot_dimension_numbers<[1], [0], [0], [1], [0, 0, 1, 1], [], []>} : vector<8x64xf32>, vector<64x64xf32>, vector<8x64xf32> -> vector<8x64xf32>
    %290 = arith.addf %288, %289 : vector<8x64xf32>
    %291 = math.tanh %290 : vector<8x64xf32>
    %292 = vector.extract_strided_slice %291 {offsets = [0, 0], sizes = [8, 32], strides = [1, 1]} : vector<8x64xf32> to vector<8x32xf32>
    %293 = arith.index_cast %284 : i32 to index
    %c0_230 = arith.constant 0 : index
    %294 = vector.load %arg14[%293, %c0_230] : memref<64x64xf32, #tpu.memory_space<vmem>>, vector<8x32xf32>
    tpu.vector_store %arg14[%293, %c0_230], %292 {strides = array<i32>} : memref<64x64xf32, #tpu.memory_space<vmem>>, vector<8x32xf32>,
    %295 = vector.extract_strided_slice %291 {offsets = [0, 32], sizes = [8, 32], strides = [1, 1]} : vector<8x64xf32> to vector<8x32xf32>
    %296 = arith.index_cast %286 : i32 to index
    %c32_231 = arith.constant 32 : index
    %297 = vector.load %arg14[%296, %c32_231] : memref<64x64xf32, #tpu.memory_space<vmem>>, vector<8x32xf32>
    tpu.vector_store %arg14[%296, %c32_231], %295 {strides = array<i32>} : memref<64x64xf32, #tpu.memory_space<vmem>>, vector<8x32xf32>,
    %c8_i32_232 = arith.constant 8 : i32
    %298 = tpu.concatenate %154, %291 in 1 : vector<8x64xf32>, vector<8x64xf32> -> vector<8x128xf32>
    %cst_233 = arith.constant dense<0.000000e+00> : vector<128xf32>
    %299 = vector.multi_reduction <add>, %298, %cst_233 [0] : vector<8x128xf32> to vector<128xf32>
    %300 = vector.shape_cast %299 : vector<128xf32> to vector<1x128xf32>
    %cst_234 = arith.constant 8.000000e+00 : f32
    %301 = vector.broadcast %cst_234 : f32 to vector<1x128xf32>
    %302 = arith.divf %300, %301 : vector<1x128xf32>
    %303 = vector.broadcast %302 : vector<1x128xf32> to vector<8x128xf32>
    %304 = arith.subf %298, %303 : vector<8x128xf32>
    %305 = arith.mulf %304, %304 : vector<8x128xf32>
    %cst_235 = arith.constant dense<0.000000e+00> : vector<128xf32>
    %306 = vector.multi_reduction <add>, %305, %cst_235 [0] : vector<8x128xf32> to vector<128xf32>
    %307 = vector.shape_cast %306 : vector<128xf32> to vector<1x128xf32>
    %cst_236 = arith.constant 8.000000e+00 : f32
    %308 = vector.broadcast %cst_236 : f32 to vector<1x128xf32>
    %309 = arith.divf %307, %308 : vector<1x128xf32>
    %310 = vector.broadcast %302 : vector<1x128xf32> to vector<8x128xf32>
    %311 = arith.subf %298, %310 : vector<8x128xf32>
    %cst_237 = arith.constant 9.99999974E-6 : f32
    %312 = vector.broadcast %cst_237 : f32 to vector<1x128xf32>
    %313 = arith.addf %309, %312 : vector<1x128xf32>
    %314 = math.rsqrt %313 : vector<1x128xf32>
    %315 = vector.broadcast %314 : vector<1x128xf32> to vector<8x128xf32>
    %316 = arith.mulf %311, %315 : vector<8x128xf32>
    %c0_238 = arith.constant 0 : index
    %c0_239 = arith.constant 0 : index
    %317 = vector.load %arg7[%c0_238, %c0_239] : memref<1x128xf32, #tpu.memory_space<vmem>>, vector<1x128xf32>
    %318 = vector.broadcast %317 : vector<1x128xf32> to vector<8x128xf32>
    %319 = arith.mulf %316, %318 : vector<8x128xf32>
    %c0_240 = arith.constant 0 : index
    %c0_241 = arith.constant 0 : index
    %320 = vector.load %arg8[%c0_240, %c0_241] : memref<1x128xf32, #tpu.memory_space<vmem>>, vector<1x128xf32>
    %321 = vector.broadcast %320 : vector<1x128xf32> to vector<8x128xf32>
    %322 = arith.addf %319, %321 : vector<8x128xf32>
    %c0_242 = arith.constant 0 : index
    %c0_243 = arith.constant 0 : index
    %323 = vector.load %arg9[%c0_242, %c0_243] : memref<128x4xf32, #tpu.memory_space<vmem>>, vector<128x4xf32>
    %cst_244 = arith.constant dense<0.000000e+00> : vector<8x4xf32>
    %324 = tpu.matmul %322, %323, %cst_244 {dimension_numbers = #tpu.dot_dimension_numbers<[1], [0], [0], [1], [0, 0, 1, 1], [], []>} : vector<8x128xf32>, vector<128x4xf32>, vector<8x4xf32> -> vector<8x4xf32>
    %c0_245 = arith.constant 0 : index
    %c0_246 = arith.constant 0 : index
    %325 = vector.load %arg10[%c0_245, %c0_246] : memref<1x4xf32, #tpu.memory_space<vmem>>, vector<1x4xf32>
    %326 = vector.broadcast %325 : vector<1x4xf32> to vector<8x4xf32>
    %327 = arith.addf %324, %326 : vector<8x4xf32>
    %c0_247 = arith.constant 0 : index
    %c0_248 = arith.constant 0 : index
    %328 = vector.load %arg11[%c0_247, %c0_248] : memref<8x4xf32, #tpu.memory_space<vmem>>, vector<8x4xf32>
    tpu.vector_store %arg11[%c0_247, %c0_248], %327 {strides = array<i32>} : memref<8x4xf32, #tpu.memory_space<vmem>>, vector<8x4xf32>,
    return
  }
}

</mosaic_0001>

<llo_original>
// kernel: tc_base_forward.1
$region0: #{tc_base_forward.1}
  #allocation0 [shape = 'u32[]', space=smem, size = 0x4, offset = 0x4, fixed_abs, tag = 'smem constant byte address 0x4 - core index']
  #allocation1 [shape = 'u32[144,128]{1,0:T(1,128)}', space=vmem, size = 0x12000, scoped, tag = 'internal scratch']
  #allocation2 [shape = 'f32[64,16]{1,0:T(8,128)}', space=vmem, size = 0x8000, scoped, tag = 'scratch operand']
  #allocation3 [shape = 'f32[64,64]{1,0:T(8,128)}', space=vmem, size = 0x8000, scoped, tag = 'scratch operand']
  #allocation4 [shape = 'f32[64,64]{1,0:T(8,128)}', space=vmem, size = 0x8000, scoped, tag = 'scratch operand']
  %s0 = inlined_call_operand.vmem [shape: f32[8,8,16], index: 0, kind: input, shape index: {}]
  %s1 = inlined_call_operand.hbm [shape: f32[16,64], index: 1, kind: input, shape index: {}]
  %s2 = inlined_call_operand.vmem [shape: f32[64,64], index: 2, kind: input, shape index: {}]
  %s3 = inlined_call_operand.vmem [shape: f32[1,64], index: 3, kind: input, shape index: {}]
  %s4 = inlined_call_operand.hbm [shape: f32[64,64], index: 4, kind: input, shape index: {}]
  %s5 = inlined_call_operand.hbm [shape: f32[64,64], index: 5, kind: input, shape index: {}]
  %s6 = inlined_call_operand.vmem [shape: f32[1,64], index: 6, kind: input, shape index: {}]
  %s7 = inlined_call_operand.vmem [shape: f32[1,128], index: 7, kind: input, shape index: {}]
  %s8 = inlined_call_operand.vmem [shape: f32[1,128], index: 8, kind: input, shape index: {}]
  %s9 = inlined_call_operand.vmem [shape: f32[128,4], index: 9, kind: input, shape index: {}]
  %s10 = inlined_call_operand.vmem [shape: f32[1,4], index: 10, kind: input, shape index: {}]
  %s11 = inlined_call_operand.vmem [shape: f32[8,4], index: 11, kind: output, shape index: {}]
  %s12 = sld [smem:[#allocation0]]
  $region66: #{tc_base_forward.1} parent=0
    _
  %s14 = ssub.s32 1, %s12
  %s15 = scalar_select 0, %s14, %s12
  $region1: #{tc_base_forward.1} parent=0
    #allocation5 [shape = 'u8[8192]{0}', space=vmem, size = 0x2000, scoped, tag = 'input window, operand 1, single buffered']
    #allocation6 [shape = 's32[1]{0}', space=sflag, size = 0x4, scoped, tag = 'scoped memory for tc_base_forward.1']
    #allocation7 [shape = 'u8[32768]{0}', space=vmem, size = 0x8000, scoped, tag = 'input window, operand 4, single buffered']
    #allocation8 [shape = 's32[1]{0}', space=sflag, size = 0x4, scoped, tag = 'scoped memory for tc_base_forward.1']
    #allocation9 [shape = 'u8[32768]{0}', space=vmem, size = 0x8000, scoped, tag = 'input window, operand 5, single buffered']
    %16 = vsyncpa [#allocation6], 0
    %17 = vsyncpa [#allocation8], 0
    // Predicated region
    $region2: #{tc_base_forward.1} parent=1 // pred_check
      _
    $region3: #{tc_base_forward.1} parent=1 // pred_check_branch
      %19 = sbr.rel (0) target = $region5
    $region4: #{tc_base_forward.1} parent=1 // pred_region
      _
    $region5: #{tc_base_forward.1} parent=1 // pred_fallthru
      _
    // Predicated region
    $region6: #{tc_base_forward.1} parent=1 // pred_check
      _
    $region7: #{tc_base_forward.1} parent=1 // pred_check_branch
      %21 = sbr.rel (0) target = $region9
    $region8: #{tc_base_forward.1} parent=1 // pred_region
      %s23 = ssub.s32 256, 256
      %24 = vsyncadd [#allocation6], %s23
      %s25 = sshll.u32 [#allocation5], 4
      %s26 = int_to_ptr.vmem [resolvable:$true] %s25
      %31 = dma.hbm_to_vmem [thread:$0]  %s1, 256, %s26, [#allocation6], 128, 128, 8
    $region9: #{tc_base_forward.1} parent=1 // pred_fallthru
      _
    // Predicated region
    $region10: #{tc_base_forward.1} parent=1 // pred_check
      _
    $region11: #{tc_base_forward.1} parent=1 // pred_check_branch
      %33 = sbr.rel (0) target = $region13
    $region12: #{tc_base_forward.1} parent=1 // pred_region
      _
    $region13: #{tc_base_forward.1} parent=1 // pred_fallthru
      _
    // Predicated region
    $region14: #{tc_base_forward.1} parent=1 // pred_check
      _
    $region15: #{tc_base_forward.1} parent=1 // pred_check_branch
      %35 = sbr.rel (0) target = $region17
    $region16: #{tc_base_forward.1} parent=1 // pred_region
      _
    $region17: #{tc_base_forward.1} parent=1 // pred_fallthru
      _
    // Predicated region
    $region18: #{tc_base_forward.1} parent=1 // pred_check
      _
    $region19: #{tc_base_forward.1} parent=1 // pred_check_branch
      %37 = sbr.rel (0) target = $region21
    $region20: #{tc_base_forward.1} parent=1 // pred_region
      %s39 = ssub.s32 1024, 1024
      %40 = vsyncadd [#allocation8], %s39
      %s41 = sshll.u32 [#allocation7], 4
      %s42 = int_to_ptr.vmem [resolvable:$true] %s41
      %47 = dma.hbm_to_vmem [thread:$0]  %s4, 1024, %s42, [#allocation8], 128, 128, 8
    $region21: #{tc_base_forward.1} parent=1 // pred_fallthru
      _
    // Predicated region
    $region22: #{tc_base_forward.1} parent=1 // pred_check
      _
    $region23: #{tc_base_forward.1} parent=1 // pred_check_branch
      %49 = sbr.rel (0) target = $region25
    $region24: #{tc_base_forward.1} parent=1 // pred_region
      %s51 = ssub.s32 1024, 1024
      %52 = vsyncadd [#allocation8], %s51
      %s53 = sshll.u32 [#allocation9], 4
      %s54 = int_to_ptr.vmem [resolvable:$true] %s53
      %59 = dma.hbm_to_vmem [thread:$0]  %s5, 1024, %s54, [#allocation8], 128, 128, 8
    $region25: #{tc_base_forward.1} parent=1 // pred_fallthru
      _
    // Predicated region
    $region26: #{tc_base_forward.1} parent=1 // pred_check
      _
    $region27: #{tc_base_forward.1} parent=1 // pred_check_branch
      %61 = sbr.rel (0) target = $region29
    $region28: #{tc_base_forward.1} parent=1 // pred_region
      _
    $region29: #{tc_base_forward.1} parent=1 // pred_fallthru
      _
    // Predicated region
    $region30: #{tc_base_forward.1} parent=1 // pred_check
      _
    $region31: #{tc_base_forward.1} parent=1 // pred_check_branch
      %63 = sbr.rel (0) target = $region33
    $region32: #{tc_base_forward.1} parent=1 // pred_region
      _
    $region33: #{tc_base_forward.1} parent=1 // pred_fallthru
      _
    // Predicated region
    $region34: #{tc_base_forward.1} parent=1 // pred_check
      _
    $region35: #{tc_base_forward.1} parent=1 // pred_check_branch
      %65 = sbr.rel (0) target = $region37
    $region36: #{tc_base_forward.1} parent=1 // pred_region
      _
    $region37: #{tc_base_forward.1} parent=1 // pred_fallthru
      _
    // Predicated region
    $region38: #{tc_base_forward.1} parent=1 // pred_check
      _
    $region39: #{tc_base_forward.1} parent=1 // pred_check_branch
      %67 = sbr.rel (0) target = $region41
    $region40: #{tc_base_forward.1} parent=1 // pred_region
      _
    $region41: #{tc_base_forward.1} parent=1 // pred_fallthru
      _
    // Predicated region
    $region42: #{tc_base_forward.1} parent=1 // pred_check
      _
    $region43: #{tc_base_forward.1} parent=1 // pred_check_branch
      %69 = sbr.rel (0) target = $region45
    $region44: #{tc_base_forward.1} parent=1 // pred_region
      _
    $region45: #{tc_base_forward.1} parent=1 // pred_fallthru
      _
    // Predicated region
    $region46: #{tc_base_forward.1} parent=1 // pred_check
      _
    $region47: #{tc_base_forward.1} parent=1 // pred_check_branch
      %71 = sbr.rel (0) target = $region49
    $region48: #{tc_base_forward.1} parent=1 // pred_region
      %72 = dma.done [#allocation6], 256
    $region49: #{tc_base_forward.1} parent=1 // pred_fallthru
      _
    // Predicated region
    $region50: #{tc_base_forward.1} parent=1 // pred_check
      _
    $region51: #{tc_base_forward.1} parent=1 // pred_check_branch
      %74 = sbr.rel (0) target = $region53
    $region52: #{tc_base_forward.1} parent=1 // pred_region
      %75 = dma.done [#allocation8], 1024
    $region53: #{tc_base_forward.1} parent=1 // pred_fallthru
      _
    // Predicated region
    $region54: #{tc_base_forward.1} parent=1 // pred_check
      _
    $region55: #{tc_base_forward.1} parent=1 // pred_check_branch
      %77 = sbr.rel (0) target = $region57
    $region56: #{tc_base_forward.1} parent=1 // pred_region
      %78 = dma.done [#allocation8], 1024
    $region57: #{tc_base_forward.1} parent=1 // pred_fallthru
      _
    %v79 = vld [vmem:[%s0] sm:$0x1]
    %v80 = vld [vmem:[%s0 + $0x8] sm:$0x1]
    %v81 = vld [vmem:[%s0 + $0x10] sm:$0x1]
    %v82 = vld [vmem:[%s0 + $0x18] sm:$0x1]
    %v83 = vld [vmem:[%s0 + $0x20] sm:$0x1]
    %v84 = vld [vmem:[%s0 + $0x28] sm:$0x1]
    %v85 = vld [vmem:[%s0 + $0x30] sm:$0x1]
    %v86 = vld [vmem:[%s0 + $0x38] sm:$0x1]
    %v95 = vrot.slane %v80, 7
    %vm96 = vcmask 1041409
    %v97 = vsel %vm96, %v95, %v79
    %v98 = vrot.slane %v81, 6
    %vm99 = vcmask 1042434
    %v100 = vsel %vm99, %v98, %v97
    %v101 = vrot.slane %v82, 5
    %vm102 = vcmask 1043459
    %v103 = vsel %vm102, %v101, %v100
    %v104 = vrot.slane %v83, 4
    %vm105 = vcmask 1044484
    %v106 = vsel %vm105, %v104, %v103
    %v107 = vrot.slane %v84, 3
    %vm108 = vcmask 1045509
    %v109 = vsel %vm108, %v107, %v106
    %v110 = vrot.slane %v85, 2
    %vm111 = vcmask 1046534
    %v112 = vsel %vm111, %v110, %v109
    %v113 = vrot.slane %v86, 1
    %vm114 = vcmask 1047559
    %v115 = vsel %vm114, %v113, %v112
    %vm117 = vcmask 130048
    %118 = vst.msk [vmem:[#allocation2] sm:$0xff] %vm117, %v115
    %v119 = vld [vmem:[%s0 + $0x1] sm:$0x1]
    %v120 = vld [vmem:[%s0 + $0x9] sm:$0x1]
    %v121 = vld [vmem:[%s0 + $0x11] sm:$0x1]
    %v122 = vld [vmem:[%s0 + $0x19] sm:$0x1]
    %v123 = vld [vmem:[%s0 + $0x21] sm:$0x1]
    %v124 = vld [vmem:[%s0 + $0x29] sm:$0x1]
    %v125 = vld [vmem:[%s0 + $0x31] sm:$0x1]
    %v126 = vld [vmem:[%s0 + $0x39] sm:$0x1]
    %v135 = vrot.slane %v120, 7
    %v136 = vsel %vm96, %v135, %v119
    %v137 = vrot.slane %v121, 6
    %v138 = vsel %vm99, %v137, %v136
    %v139 = vrot.slane %v122, 5
    %v140 = vsel %vm102, %v139, %v138
    %v141 = vrot.slane %v123, 4
    %v142 = vsel %vm105, %v141, %v140
    %v143 = vrot.slane %v124, 3
    %v144 = vsel %vm108, %v143, %v142
    %v145 = vrot.slane %v125, 2
    %v146 = vsel %vm111, %v145, %v144
    %v147 = vrot.slane %v126, 1
    %v148 = vsel %vm114, %v147, %v146
    %150 = vst.msk [vmem:[#allocation2 + $0x8] sm:$0xff] %vm117, %v148
    %v151 = vld [vmem:[%s0 + $0x2] sm:$0x1]
    %v152 = vld [vmem:[%s0 + $0xa] sm:$0x1]
    %v153 = vld [vmem:[%s0 + $0x12] sm:$0x1]
    %v154 = vld [vmem:[%s0 + $0x1a] sm:$0x1]
    %v155 = vld [vmem:[%s0 + $0x22] sm:$0x1]
    %v156 = vld [vmem:[%s0 + $0x2a] sm:$0x1]
    %v157 = vld [vmem:[%s0 + $0x32] sm:$0x1]
    %v158 = vld [vmem:[%s0 + $0x3a] sm:$0x1]
    %v167 = vrot.slane %v152, 7
    %v168 = vsel %vm96, %v167, %v151
    %v169 = vrot.slane %v153, 6
    %v170 = vsel %vm99, %v169, %v168
    %v171 = vrot.slane %v154, 5
    %v172 = vsel %vm102, %v171, %v170
    %v173 = vrot.slane %v155, 4
    %v174 = vsel %vm105, %v173, %v172
    %v175 = vrot.slane %v156, 3
    %v176 = vsel %vm108, %v175, %v174
    %v177 = vrot.slane %v157, 2
    %v178 = vsel %vm111, %v177, %v176
    %v179 = vrot.slane %v158, 1
    %v180 = vsel %vm114, %v179, %v178
    %182 = vst.msk [vmem:[#allocation2 + $0x10] sm:$0xff] %vm117, %v180
    %v183 = vld [vmem:[%s0 + $0x3] sm:$0x1]
    %v184 = vld [vmem:[%s0 + $0xb] sm:$0x1]
    %v185 = vld [vmem:[%s0 + $0x13] sm:$0x1]
    %v186 = vld [vmem:[%s0 + $0x1b] sm:$0x1]
    %v187 = vld [vmem:[%s0 + $0x23] sm:$0x1]
    %v188 = vld [vmem:[%s0 + $0x2b] sm:$0x1]
    %v189 = vld [vmem:[%s0 + $0x33] sm:$0x1]
    %v190 = vld [vmem:[%s0 + $0x3b] sm:$0x1]
    %v199 = vrot.slane %v184, 7
    %v200 = vsel %vm96, %v199, %v183
    %v201 = vrot.slane %v185, 6
    %v202 = vsel %vm99, %v201, %v200
    %v203 = vrot.slane %v186, 5
    %v204 = vsel %vm102, %v203, %v202
    %v205 = vrot.slane %v187, 4
    %v206 = vsel %vm105, %v205, %v204
    %v207 = vrot.slane %v188, 3
    %v208 = vsel %vm108, %v207, %v206
    %v209 = vrot.slane %v189, 2
    %v210 = vsel %vm111, %v209, %v208
    %v211 = vrot.slane %v190, 1
    %v212 = vsel %vm114, %v211, %v210
    %214 = vst.msk [vmem:[#allocation2 + $0x18] sm:$0xff] %vm117, %v212
    %v215 = vld [vmem:[%s0 + $0x4] sm:$0x1]
    %v216 = vld [vmem:[%s0 + $0xc] sm:$0x1]
    %v217 = vld [vmem:[%s0 + $0x14] sm:$0x1]
    %v218 = vld [vmem:[%s0 + $0x1c] sm:$0x1]
    %v219 = vld [vmem:[%s0 + $0x24] sm:$0x1]
    %v220 = vld [vmem:[%s0 + $0x2c] sm:$0x1]
    %v221 = vld [vmem:[%s0 + $0x34] sm:$0x1]
    %v222 = vld [vmem:[%s0 + $0x3c] sm:$0x1]
    %v231 = vrot.slane %v216, 7
    %v232 = vsel %vm96, %v231, %v215
    %v233 = vrot.slane %v217, 6
    %v234 = vsel %vm99, %v233, %v232
    %v235 = vrot.slane %v218, 5
    %v236 = vsel %vm102, %v235, %v234
    %v237 = vrot.slane %v219, 4
    %v238 = vsel %vm105, %v237, %v236
    %v239 = vrot.slane %v220, 3
    %v240 = vsel %vm108, %v239, %v238
    %v241 = vrot.slane %v221, 2
    %v242 = vsel %vm111, %v241, %v240
    %v243 = vrot.slane %v222, 1
    %v244 = vsel %vm114, %v243, %v242
    %246 = vst.msk [vmem:[#allocation2 + $0x20] sm:$0xff] %vm117, %v244
    %v247 = vld [vmem:[%s0 + $0x5] sm:$0x1]
    %v248 = vld [vmem:[%s0 + $0xd] sm:$0x1]
    %v249 = vld [vmem:[%s0 + $0x15] sm:$0x1]
    %v250 = vld [vmem:[%s0 + $0x1d] sm:$0x1]
    %v251 = vld [vmem:[%s0 + $0x25] sm:$0x1]
    %v252 = vld [vmem:[%s0 + $0x2d] sm:$0x1]
    %v253 = vld [vmem:[%s0 + $0x35] sm:$0x1]
    %v254 = vld [vmem:[%s0 + $0x3d] sm:$0x1]
    %v263 = vrot.slane %v248, 7
    %v264 = vsel %vm96, %v263, %v247
    %v265 = vrot.slane %v249, 6
    %v266 = vsel %vm99, %v265, %v264
    %v267 = vrot.slane %v250, 5
    %v268 = vsel %vm102, %v267, %v266
    %v269 = vrot.slane %v251, 4
    %v270 = vsel %vm105, %v269, %v268
    %v271 = vrot.slane %v252, 3
    %v272 = vsel %vm108, %v271, %v270
    %v273 = vrot.slane %v253, 2
    %v274 = vsel %vm111, %v273, %v272
    %v275 = vrot.slane %v254, 1
    %v276 = vsel %vm114, %v275, %v274
    %278 = vst.msk [vmem:[#allocation2 + $0x28] sm:$0xff] %vm117, %v276
    %v279 = vld [vmem:[%s0 + $0x6] sm:$0x1]
    %v280 = vld [vmem:[%s0 + $0xe] sm:$0x1]
    %v281 = vld [vmem:[%s0 + $0x16] sm:$0x1]
    %v282 = vld [vmem:[%s0 + $0x1e] sm:$0x1]
    %v283 = vld [vmem:[%s0 + $0x26] sm:$0x1]
    %v284 = vld [vmem:[%s0 + $0x2e] sm:$0x1]
    %v285 = vld [vmem:[%s0 + $0x36] sm:$0x1]
    %v286 = vld [vmem:[%s0 + $0x3e] sm:$0x1]
    %v295 = vrot.slane %v280, 7
    %v296 = vsel %vm96, %v295, %v279
    %v297 = vrot.slane %v281, 6
    %v298 = vsel %vm99, %v297, %v296
    %v299 = vrot.slane %v282, 5
    %v300 = vsel %vm102, %v299, %v298
    %v301 = vrot.slane %v283, 4
    %v302 = vsel %vm105, %v301, %v300
    %v303 = vrot.slane %v284, 3
    %v304 = vsel %vm108, %v303, %v302
    %v305 = vrot.slane %v285, 2
    %v306 = vsel %vm111, %v305, %v304
    %v307 = vrot.slane %v286, 1
    %v308 = vsel %vm114, %v307, %v306
    %310 = vst.msk [vmem:[#allocation2 + $0x30] sm:$0xff] %vm117, %v308
    %v311 = vld [vmem:[%s0 + $0x7] sm:$0x1]
    %v312 = vld [vmem:[%s0 + $0xf] sm:$0x1]
    %v313 = vld [vmem:[%s0 + $0x17] sm:$0x1]
    %v314 = vld [vmem:[%s0 + $0x1f] sm:$0x1]
    %v315 = vld [vmem:[%s0 + $0x27] sm:$0x1]
    %v316 = vld [vmem:[%s0 + $0x2f] sm:$0x1]
    %v317 = vld [vmem:[%s0 + $0x37] sm:$0x1]
    %v318 = vld [vmem:[%s0 + $0x3f] sm:$0x1]
    %v327 = vrot.slane %v312, 7
    %v328 = vsel %vm96, %v327, %v311
    %v329 = vrot.slane %v313, 6
    %v330 = vsel %vm99, %v329, %v328
    %v331 = vrot.slane %v314, 5
    %v332 = vsel %vm102, %v331, %v330
    %v333 = vrot.slane %v315, 4
    %v334 = vsel %vm105, %v333, %v332
    %v335 = vrot.slane %v316, 3
    %v336 = vsel %vm108, %v335, %v334
    %v337 = vrot.slane %v317, 2
    %v338 = vsel %vm111, %v337, %v336
    %v339 = vrot.slane %v318, 1
    %v340 = vsel %vm114, %v339, %v338
    %342 = vst.msk [vmem:[#allocation2 + $0x38] sm:$0xff] %vm117, %v340
    %v343 = vld [vmem:[#allocation2] sm:$0xff]
    %v344 = vld [vmem:[#allocation2 + $0x8] sm:$0xff]
    %v345 = vld [vmem:[#allocation2 + $0x10] sm:$0xff]
    %v346 = vld [vmem:[#allocation2 + $0x18] sm:$0xff]
    %v347 = vld [vmem:[#allocation2 + $0x20] sm:$0xff]
    %v348 = vld [vmem:[#allocation2 + $0x28] sm:$0xff]
    %v349 = vld [vmem:[#allocation2 + $0x30] sm:$0xff]
    %v350 = vld [vmem:[#allocation2 + $0x38] sm:$0xff]
    %v351 = vld [vmem:[#allocation5] sm:$0xff]
    %v352 = vld [vmem:[#allocation5 + $0x8] sm:$0xff]
    %v353 = vld [vmem:[%s3] sm:$0x1]
    %v355 = vlaneseq
    %v356 = vshrl.u32 %v355, 7
    %v357 = vsub.s32 0, %v356
    %v358 = vrot.slane %v353, %v357
    %v361 = vsel %vm117, %v343, 0
    %v364 = vsel %vm117, %v344, 0
    %v367 = vsel %vm117, %v345, 0
    %v370 = vsel %vm117, %v346, 0
    %v373 = vsel %vm117, %v347, 0
    %v376 = vsel %vm117, %v348, 0
    %v379 = vsel %vm117, %v349, 0
    %v382 = vsel %vm117, %v350, 0
    %384 = vmatprep.subr.mxu0 0.0
    %385 = vmatpush1.msra.mxu0 %v351
    %386 = vmatprep.subr.mxu0 0.0
    %387 = vmatpush1.msra.mxu0 %v352
    %388 = vmatprep.subr.mxu0 0.0
    %389 = vmatpush1.msra.mxu0 0.0
    %390 = vmatprep.subr.mxu0 0.0
    %391 = vmatpush1.msra.mxu0 0.0
    %392 = vmatprep.subr.mxu0 0.0
    %393 = vmatpush1.msra.mxu0 0.0
    %394 = vmatprep.subr.mxu0 0.0
    %395 = vmatpush1.msra.mxu0 0.0
    %396 = vmatprep.subr.mxu0 0.0
    %397 = vmatpush1.msra.mxu0 0.0
    %398 = vmatprep.subr.mxu0 0.0
    %399 = vmatpush1.msra.mxu0 0.0
    %400 = vmatprep.subr.mxu0 0.0
    %401 = vmatpush1.msra.mxu0 0.0
    %402 = vmatprep.subr.mxu0 0.0
    %403 = vmatpush1.msra.mxu0 0.0
    %404 = vmatprep.subr.mxu0 0.0
    %405 = vmatpush1.msra.mxu0 0.0
    %406 = vmatprep.subr.mxu0 0.0
    %407 = vmatpush1.msra.mxu0 0.0
    %408 = vmatprep.subr.mxu0 0.0
    %409 = vmatpush1.msra.mxu0 0.0
    %410 = vmatprep.subr.mxu0 0.0
    %411 = vmatpush1.msra.mxu0 0.0
    %412 = vmatprep.subr.mxu0 0.0
    %413 = vmatpush1.msra.mxu0 0.0
    %414 = vmatprep.subr.mxu0 0.0
    %415 = vmatpush1.msra.mxu0 0.0
    %416 = vmatprep.subr.mxu0 0.0
    %417 = vmatpush1.msra.mxu0 0.0
    %418 = vmatprep.subr.mxu0 0.0
    %419 = vmatpush1.msra.mxu0 0.0
    %420 = vmatprep.subr.mxu0 0.0
    %421 = vmatpush1.msra.mxu0 0.0
    %422 = vmatprep.subr.mxu0 0.0
    %423 = vmatpush1.msra.mxu0 0.0
    %424 = vmatprep.subr.mxu0 0.0
    %425 = vmatpush1.msra.mxu0 0.0
    %426 = vmatprep.subr.mxu0 0.0
    %427 = vmatpush1.msra.mxu0 0.0
    %428 = vmatprep.subr.mxu0 0.0
    %429 = vmatpush1.msra.mxu0 0.0
    %430 = vmatprep.subr.mxu0 0.0
    %431 = vmatpush1.msra.mxu0 0.0
    %432 = vmatprep.subr.mxu0 0.0
    %433 = vmatpush1.msra.mxu0 0.0
    %434 = vmatprep.subr.mxu0 0.0
    %435 = vmatpush1.msra.mxu0 0.0
    %436 = vmatprep.subr.mxu0 0.0
    %437 = vmatpush1.msra.mxu0 0.0
    %438 = vmatprep.subr.mxu0 0.0
    %439 = vmatpush1.msra.mxu0 0.0
    %440 = vmatprep.subr.mxu0 0.0
    %441 = vmatpush1.msra.mxu0 0.0
    %442 = vmatprep.subr.mxu0 0.0
    %443 = vmatpush1.msra.mxu0 0.0
    %444 = vmatprep.subr.mxu0 0.0
    %445 = vmatpush1.msra.mxu0 0.0
    %446 = vmatprep.subr.mxu0 0.0
    %447 = vmatpush1.msra.mxu0 0.0
    %448 = vmatprep.mubr.f32.mxu0 0.0
    %449 = vmatmul.mubr.f32.gmra.mrb[0].mxu0 %v361
    %v450 = vpop.f32.mrb[0].mxu0
    %v451 = vadd.f32 %v358, %v450
    %v452 = vpop.f32.mrb[0].mxu0
    %453 = vmatprep.mubr.f32.mxu0 0.0
    %454 = vmatmul.mubr.f32.gmra.mrb[0].mxu0 %v364
    %v455 = vpop.f32.mrb[0].mxu0
    %v456 = vadd.f32 %v358, %v455
    %v457 = vpop.f32.mrb[0].mxu0
    %458 = vmatprep.mubr.f32.mxu0 0.0
    %459 = vmatmul.mubr.f32.gmra.mrb[0].mxu0 %v367
    %v460 = vpop.f32.mrb[0].mxu0
    %v461 = vadd.f32 %v358, %v460
    %v462 = vpop.f32.mrb[0].mxu0
    %463 = vmatprep.mubr.f32.mxu0 0.0
    %464 = vmatmul.mubr.f32.gmra.mrb[0].mxu0 %v370
    %v465 = vpop.f32.mrb[0].mxu0
    %v466 = vadd.f32 %v358, %v465
    %v467 = vpop.f32.mrb[0].mxu0
    %468 = vmatprep.mubr.f32.mxu0 0.0
    %469 = vmatmul.mubr.f32.gmra.mrb[0].mxu0 %v373
    %v470 = vpop.f32.mrb[0].mxu0
    %v471 = vadd.f32 %v358, %v470
    %v472 = vpop.f32.mrb[0].mxu0
    %473 = vmatprep.mubr.f32.mxu0 0.0
    %474 = vmatmul.mubr.f32.gmra.mrb[0].mxu0 %v376
    %v475 = vpop.f32.mrb[0].mxu0
    %v476 = vadd.f32 %v358, %v475
    %v477 = vpop.f32.mrb[0].mxu0
    %478 = vmatprep.mubr.f32.mxu0 0.0
    %479 = vmatmul.mubr.f32.gmra.mrb[0].mxu0 %v379
    %v480 = vpop.f32.mrb[0].mxu0
    %v481 = vadd.f32 %v358, %v480
    %v482 = vpop.f32.mrb[0].mxu0
    %483 = vmatprep.mubr.f32.mxu0 0.0
    %484 = vmatmul.mubr.f32.gmra.mrb[0].mxu0 %v382
    %v485 = vpop.f32.mrb[0].mxu0
    %v486 = vadd.f32 %v358, %v485
    %v487 = vpop.f32.mrb[0].mxu0
    %488 = vdwg.mxu0
    %vm489 = vcmask 523264
    %490 = vst.msk [vmem:[#allocation3] sm:$0xff] %vm489, %v451
    %491 = vst.msk [vmem:[#allocation3 + $0x8] sm:$0xff] %vm489, %v456
    %492 = vst.msk [vmem:[#allocation3 + $0x10] sm:$0xff] %vm489, %v461
    %493 = vst.msk [vmem:[#allocation3 + $0x18] sm:$0xff] %vm489, %v466
    %494 = vst.msk [vmem:[#allocation3 + $0x20] sm:$0xff] %vm489, %v471
    %495 = vst.msk [vmem:[#allocation3 + $0x28] sm:$0xff] %vm489, %v476
    %496 = vst.msk [vmem:[#allocation3 + $0x30] sm:$0xff] %vm489, %v481
    %497 = vst.msk [vmem:[#allocation3 + $0x38] sm:$0xff] %vm489, %v486
    %v498 = vld [vmem:[#allocation3] sm:$0xff]
    %v499 = vld [vmem:[#allocation3 + $0x38] sm:$0xff]
    %vm500 = vcmask 523520
    %501 = vst.msk [vmem:[#allocation3] sm:$0xff] %vm500, %v499
    %502 = vst.msk [vmem:[#allocation3 + $0x38] sm:$0xff] %vm500, %v498
    %v503 = vld [vmem:[#allocation3 + $0x8] sm:$0xff]
    %v504 = vld [vmem:[#allocation3 + $0x30] sm:$0xff]
    %505 = vst.msk [vmem:[#allocation3 + $0x8] sm:$0xff] %vm500, %v504
    %506 = vst.msk [vmem:[#allocation3 + $0x30] sm:$0xff] %vm500, %v503
    %v507 = vld [vmem:[#allocation3 + $0x10] sm:$0xff]
    %v508 = vld [vmem:[#allocation3 + $0x28] sm:$0xff]
    %509 = vst.msk [vmem:[#allocation3 + $0x10] sm:$0xff] %vm500, %v508
    %510 = vst.msk [vmem:[#allocation3 + $0x28] sm:$0xff] %vm500, %v507
    %v511 = vld [vmem:[#allocation3 + $0x18] sm:$0xff]
    %v512 = vld [vmem:[#allocation3 + $0x20] sm:$0xff]
    %513 = vst.msk [vmem:[#allocation3 + $0x18] sm:$0xff] %vm500, %v512
    %514 = vst.msk [vmem:[#allocation3 + $0x20] sm:$0xff] %vm500, %v511
    %v515 = vld [vmem:[%s2] sm:$0xff]
    %v516 = vld [vmem:[%s2 + $0x8] sm:$0xff]
    %v517 = vld [vmem:[%s2 + $0x10] sm:$0xff]
    %v518 = vld [vmem:[%s2 + $0x18] sm:$0xff]
    %v519 = vld [vmem:[%s2 + $0x20] sm:$0xff]
    %v520 = vld [vmem:[%s2 + $0x28] sm:$0xff]
    %v521 = vld [vmem:[%s2 + $0x30] sm:$0xff]
    %v522 = vld [vmem:[%s2 + $0x38] sm:$0xff]
    %v523 = vld [vmem:[#allocation3] sm:$0xff]
    %v525 = vsel %vm489, 0.0, 0
    %527 = vmatprep.subr.mxu0 0.0
    %528 = vmatpush1.msra.mxu0 %v515
    %529 = vmatprep.subr.mxu0 0.0
    %530 = vmatpush1.msra.mxu0 %v516
    %531 = vmatprep.subr.mxu0 0.0
    %532 = vmatpush1.msra.mxu0 %v517
    %533 = vmatprep.subr.mxu0 0.0
    %534 = vmatpush1.msra.mxu0 %v518
    %535 = vmatprep.subr.mxu0 0.0
    %536 = vmatpush1.msra.mxu0 %v519
    %537 = vmatprep.subr.mxu0 0.0
    %538 = vmatpush1.msra.mxu0 %v520
    %539 = vmatprep.subr.mxu0 0.0
    %540 = vmatpush1.msra.mxu0 %v521
    %541 = vmatprep.subr.mxu0 0.0
    %542 = vmatpush1.msra.mxu0 %v522
    %543 = vmatprep.subr.mxu0 0.0
    %544 = vmatpush1.msra.mxu0 0.0
    %545 = vmatprep.subr.mxu0 0.0
    %546 = vmatpush1.msra.mxu0 0.0
    %547 = vmatprep.subr.mxu0 0.0
    %548 = vmatpush1.msra.mxu0 0.0
    %549 = vmatprep.subr.mxu0 0.0
    %550 = vmatpush1.msra.mxu0 0.0
    %551 = vmatprep.subr.mxu0 0.0
    %552 = vmatpush1.msra.mxu0 0.0
    %553 = vmatprep.subr.mxu0 0.0
    %554 = vmatpush1.msra.mxu0 0.0
    %555 = vmatprep.subr.mxu0 0.0
    %556 = vmatpush1.msra.mxu0 0.0
    %557 = vmatprep.subr.mxu0 0.0
    %558 = vmatpush1.msra.mxu0 0.0
    %559 = vmatprep.subr.mxu0 0.0
    %560 = vmatpush1.msra.mxu0 0.0
    %561 = vmatprep.subr.mxu0 0.0
    %562 = vmatpush1.msra.mxu0 0.0
    %563 = vmatprep.subr.mxu0 0.0
    %564 = vmatpush1.msra.mxu0 0.0
    %565 = vmatprep.subr.mxu0 0.0
    %566 = vmatpush1.msra.mxu0 0.0
    %567 = vmatprep.subr.mxu0 0.0
    %568 = vmatpush1.msra.mxu0 0.0
    %569 = vmatprep.subr.mxu0 0.0
    %570 = vmatpush1.msra.mxu0 0.0
    %571 = vmatprep.subr.mxu0 0.0
    %572 = vmatpush1.msra.mxu0 0.0
    %573 = vmatprep.subr.mxu0 0.0
    %574 = vmatpush1.msra.mxu0 0.0
    %575 = vmatprep.subr.mxu0 0.0
    %576 = vmatpush1.msra.mxu0 0.0
    %577 = vmatprep.subr.mxu0 0.0
    %578 = vmatpush1.msra.mxu0 0.0
    %579 = vmatprep.subr.mxu0 0.0
    %580 = vmatpush1.msra.mxu0 0.0
    %581 = vmatprep.subr.mxu0 0.0
    %582 = vmatpush1.msra.mxu0 0.0
    %583 = vmatprep.subr.mxu0 0.0
    %584 = vmatpush1.msra.mxu0 0.0
    %585 = vmatprep.subr.mxu0 0.0
    %586 = vmatpush1.msra.mxu0 0.0
    %587 = vmatprep.subr.mxu0 0.0
    %588 = vmatpush1.msra.mxu0 0.0
    %589 = vmatprep.subr.mxu0 0.0
    %590 = vmatpush1.msra.mxu0 0.0
    %591 = vmatprep.mubr.f32.mxu0 0.0
    %592 = vmatmul.mubr.f32.gmra.mrb[0].mxu0 %v525
    %v593 = vpop.f32.mrb[0].mxu0
    %v594 = vadd.f32 0.0, %v593
    %v595 = vpop.f32.mrb[0].mxu0
    %596 = vdwg.mxu0
    %v597 = vadd.f32 %v523, %v594
    %v598 = vtanh.pop %v597
    %vm599 = vcmask 261120
    %600 = vst.msk [vmem:[#allocation4] sm:$0xff] %vm599, %v598
    %601 = vst.msk [vmem:[#allocation4 + $0x38] sm:$0xff] %vm500, %v598
    %v602 = vld [vmem:[#allocation3 + $0x8] sm:$0xff]
    %v604 = vsel %vm489, %v598, 0
    %606 = vmatprep.subr.mxu0 0.0
    %607 = vmatpush1.msra.mxu0 %v515
    %608 = vmatprep.subr.mxu0 0.0
    %609 = vmatpush1.msra.mxu0 %v516
    %610 = vmatprep.subr.mxu0 0.0
    %611 = vmatpush1.msra.mxu0 %v517
    %612 = vmatprep.subr.mxu0 0.0
    %613 = vmatpush1.msra.mxu0 %v518
    %614 = vmatprep.subr.mxu0 0.0
    %615 = vmatpush1.msra.mxu0 %v519
    %616 = vmatprep.subr.mxu0 0.0
    %617 = vmatpush1.msra.mxu0 %v520
    %618 = vmatprep.subr.mxu0 0.0
    %619 = vmatpush1.msra.mxu0 %v521
    %620 = vmatprep.subr.mxu0 0.0
    %621 = vmatpush1.msra.mxu0 %v522
    %622 = vmatprep.subr.mxu0 0.0
    %623 = vmatpush1.msra.mxu0 0.0
    %624 = vmatprep.subr.mxu0 0.0
    %625 = vmatpush1.msra.mxu0 0.0
    %626 = vmatprep.subr.mxu0 0.0
    %627 = vmatpush1.msra.mxu0 0.0
    %628 = vmatprep.subr.mxu0 0.0
    %629 = vmatpush1.msra.mxu0 0.0
    %630 = vmatprep.subr.mxu0 0.0
    %631 = vmatpush1.msra.mxu0 0.0
    %632 = vmatprep.subr.mxu0 0.0
    %633 = vmatpush1.msra.mxu0 0.0
    %634 = vmatprep.subr.mxu0 0.0
    %635 = vmatpush1.msra.mxu0 0.0
    %636 = vmatprep.subr.mxu0 0.0
    %637 = vmatpush1.msra.mxu0 0.0
    %638 = vmatprep.subr.mxu0 0.0
    %639 = vmatpush1.msra.mxu0 0.0
    %640 = vmatprep.subr.mxu0 0.0
    %641 = vmatpush1.msra.mxu0 0.0
    %642 = vmatprep.subr.mxu0 0.0
    %643 = vmatpush1.msra.mxu0 0.0
    %644 = vmatprep.subr.mxu0 0.0
    %645 = vmatpush1.msra.mxu0 0.0
    %646 = vmatprep.subr.mxu0 0.0
    %647 = vmatpush1.msra.mxu0 0.0
    %648 = vmatprep.subr.mxu0 0.0
    %649 = vmatpush1.msra.mxu0 0.0
    %650 = vmatprep.subr.mxu0 0.0
    %651 = vmatpush1.msra.mxu0 0.0
    %652 = vmatprep.subr.mxu0 0.0
    %653 = vmatpush1.msra.mxu0 0.0
    %654 = vmatprep.subr.mxu0 0.0
    %655 = vmatpush1.msra.mxu0 0.0
    %656 = vmatprep.subr.mxu0 0.0
    %657 = vmatpush1.msra.mxu0 0.0
    %658 = vmatprep.subr.mxu0 0.0
    %659 = vmatpush1.msra.mxu0 0.0
    %660 = vmatprep.subr.mxu0 0.0
    %661 = vmatpush1.msra.mxu0 0.0
    %662 = vmatprep.subr.mxu0 0.0
    %663 = vmatpush1.msra.mxu0 0.0
    %664 = vmatprep.subr.mxu0 0.0
    %665 = vmatpush1.msra.mxu0 0.0
    %666 = vmatprep.subr.mxu0 0.0
    %667 = vmatpush1.msra.mxu0 0.0
    %668 = vmatprep.subr.mxu0 0.0
    %669 = vmatpush1.msra.mxu0 0.0
    %670 = vmatprep.mubr.f32.mxu0 0.0
    %671 = vmatmul.mubr.f32.gmra.mrb[0].mxu0 %v604
    %v672 = vpop.f32.mrb[0].mxu0
    %v673 = vadd.f32 0.0, %v672
    %v674 = vpop.f32.mrb[0].mxu0
    %675 = vdwg.mxu0
    %v676 = vadd.f32 %v602, %v673
    %v677 = vtanh.pop %v676
    %678 = vst.msk [vmem:[#allocation4 + $0x8] sm:$0xff] %vm599, %v677
    %679 = vst.msk [vmem:[#allocation4 + $0x30] sm:$0xff] %vm500, %v677
    %v680 = vld [vmem:[#allocation3 + $0x10] sm:$0xff]
    %v682 = vsel %vm489, %v677, 0
    %684 = vmatprep.subr.mxu0 0.0
    %685 = vmatpush1.msra.mxu0 %v515
    %686 = vmatprep.subr.mxu0 0.0
    %687 = vmatpush1.msra.mxu0 %v516
    %688 = vmatprep.subr.mxu0 0.0
    %689 = vmatpush1.msra.mxu0 %v517
    %690 = vmatprep.subr.mxu0 0.0
    %691 = vmatpush1.msra.mxu0 %v518
    %692 = vmatprep.subr.mxu0 0.0
    %693 = vmatpush1.msra.mxu0 %v519
    %694 = vmatprep.subr.mxu0 0.0
    %695 = vmatpush1.msra.mxu0 %v520
    %696 = vmatprep.subr.mxu0 0.0
    %697 = vmatpush1.msra.mxu0 %v521
    %698 = vmatprep.subr.mxu0 0.0
    %699 = vmatpush1.msra.mxu0 %v522
    %700 = vmatprep.subr.mxu0 0.0
    %701 = vmatpush1.msra.mxu0 0.0
    %702 = vmatprep.subr.mxu0 0.0
    %703 = vmatpush1.msra.mxu0 0.0
    %704 = vmatprep.subr.mxu0 0.0
    %705 = vmatpush1.msra.mxu0 0.0
    %706 = vmatprep.subr.mxu0 0.0
    %707 = vmatpush1.msra.mxu0 0.0
    %708 = vmatprep.subr.mxu0 0.0
    %709 = vmatpush1.msra.mxu0 0.0
    %710 = vmatprep.subr.mxu0 0.0
    %711 = vmatpush1.msra.mxu0 0.0
    %712 = vmatprep.subr.mxu0 0.0
    %713 = vmatpush1.msra.mxu0 0.0
    %714 = vmatprep.subr.mxu0 0.0
    %715 = vmatpush1.msra.mxu0 0.0
    %716 = vmatprep.subr.mxu0 0.0
    %717 = vmatpush1.msra.mxu0 0.0
    %718 = vmatprep.subr.mxu0 0.0
    %719 = vmatpush1.msra.mxu0 0.0
    %720 = vmatprep.subr.mxu0 0.0
    %721 = vmatpush1.msra.mxu0 0.0
    %722 = vmatprep.subr.mxu0 0.0
    %723 = vmatpush1.msra.mxu0 0.0
    %724 = vmatprep.subr.mxu0 0.0
    %725 = vmatpush1.msra.mxu0 0.0
    %726 = vmatprep.subr.mxu0 0.0
    %727 = vmatpush1.msra.mxu0 0.0
    %728 = vmatprep.subr.mxu0 0.0
    %729 = vmatpush1.msra.mxu0 0.0
    %730 = vmatprep.subr.mxu0 0.0
    %731 = vmatpush1.msra.mxu0 0.0
    %732 = vmatprep.subr.mxu0 0.0
    %733 = vmatpush1.msra.mxu0 0.0
    %734 = vmatprep.subr.mxu0 0.0
    %735 = vmatpush1.msra.mxu0 0.0
    %736 = vmatprep.subr.mxu0 0.0
    %737 = vmatpush1.msra.mxu0 0.0
    %738 = vmatprep.subr.mxu0 0.0
    %739 = vmatpush1.msra.mxu0 0.0
    %740 = vmatprep.subr.mxu0 0.0
    %741 = vmatpush1.msra.mxu0 0.0
    %742 = vmatprep.subr.mxu0 0.0
    %743 = vmatpush1.msra.mxu0 0.0
    %744 = vmatprep.subr.mxu0 0.0
    %745 = vmatpush1.msra.mxu0 0.0
    %746 = vmatprep.subr.mxu0 0.0
    %747 = vmatpush1.msra.mxu0 0.0
    %748 = vmatprep.mubr.f32.mxu0 0.0
    %749 = vmatmul.mubr.f32.gmra.mrb[0].mxu0 %v682
    %v750 = vpop.f32.mrb[0].mxu0
    %v751 = vadd.f32 0.0, %v750
    %v752 = vpop.f32.mrb[0].mxu0
    %753 = vdwg.mxu0
    %v754 = vadd.f32 %v680, %v751
    %v755 = vtanh.pop %v754
    %756 = vst.msk [vmem:[#allocation4 + $0x10] sm:$0xff] %vm599, %v755
    %757 = vst.msk [vmem:[#allocation4 + $0x28] sm:$0xff] %vm500, %v755
    %v758 = vld [vmem:[#allocation3 + $0x18] sm:$0xff]
    %v760 = vsel %vm489, %v755, 0
    %762 = vmatprep.subr.mxu0 0.0
    %763 = vmatpush1.msra.mxu0 %v515
    %764 = vmatprep.subr.mxu0 0.0
    %765 = vmatpush1.msra.mxu0 %v516
    %766 = vmatprep.subr.mxu0 0.0
    %767 = vmatpush1.msra.mxu0 %v517
    %768 = vmatprep.subr.mxu0 0.0
    %769 = vmatpush1.msra.mxu0 %v518
    %770 = vmatprep.subr.mxu0 0.0
    %771 = vmatpush1.msra.mxu0 %v519
    %772 = vmatprep.subr.mxu0 0.0
    %773 = vmatpush1.msra.mxu0 %v520
    %774 = vmatprep.subr.mxu0 0.0
    %775 = vmatpush1.msra.mxu0 %v521
    %776 = vmatprep.subr.mxu0 0.0
    %777 = vmatpush1.msra.mxu0 %v522
    %778 = vmatprep.subr.mxu0 0.0
    %779 = vmatpush1.msra.mxu0 0.0
    %780 = vmatprep.subr.mxu0 0.0
    %781 = vmatpush1.msra.mxu0 0.0
    %782 = vmatprep.subr.mxu0 0.0
    %783 = vmatpush1.msra.mxu0 0.0
    %784 = vmatprep.subr.mxu0 0.0
    %785 = vmatpush1.msra.mxu0 0.0
    %786 = vmatprep.subr.mxu0 0.0
    %787 = vmatpush1.msra.mxu0 0.0
    %788 = vmatprep.subr.mxu0 0.0
    %789 = vmatpush1.msra.mxu0 0.0
    %790 = vmatprep.subr.mxu0 0.0
    %791 = vmatpush1.msra.mxu0 0.0
    %792 = vmatprep.subr.mxu0 0.0
    %793 = vmatpush1.msra.mxu0 0.0
    %794 = vmatprep.subr.mxu0 0.0
    %795 = vmatpush1.msra.mxu0 0.0
    %796 = vmatprep.subr.mxu0 0.0
    %797 = vmatpush1.msra.mxu0 0.0
    %798 = vmatprep.subr.mxu0 0.0
    %799 = vmatpush1.msra.mxu0 0.0
    %800 = vmatprep.subr.mxu0 0.0
    %801 = vmatpush1.msra.mxu0 0.0
    %802 = vmatprep.subr.mxu0 0.0
    %803 = vmatpush1.msra.mxu0 0.0
    %804 = vmatprep.subr.mxu0 0.0
    %805 = vmatpush1.msra.mxu0 0.0
    %806 = vmatprep.subr.mxu0 0.0
    %807 = vmatpush1.msra.mxu0 0.0
    %808 = vmatprep.subr.mxu0 0.0
    %809 = vmatpush1.msra.mxu0 0.0
    %810 = vmatprep.subr.mxu0 0.0
    %811 = vmatpush1.msra.mxu0 0.0
    %812 = vmatprep.subr.mxu0 0.0
    %813 = vmatpush1.msra.mxu0 0.0
    %814 = vmatprep.subr.mxu0 0.0
    %815 = vmatpush1.msra.mxu0 0.0
    %816 = vmatprep.subr.mxu0 0.0
    %817 = vmatpush1.msra.mxu0 0.0
    %818 = vmatprep.subr.mxu0 0.0
    %819 = vmatpush1.msra.mxu0 0.0
    %820 = vmatprep.subr.mxu0 0.0
    %821 = vmatpush1.msra.mxu0 0.0
    %822 = vmatprep.subr.mxu0 0.0
    %823 = vmatpush1.msra.mxu0 0.0
    %824 = vmatprep.subr.mxu0 0.0
    %825 = vmatpush1.msra.mxu0 0.0
    %826 = vmatprep.mubr.f32.mxu0 0.0
    %827 = vmatmul.mubr.f32.gmra.mrb[0].mxu0 %v760
    %v828 = vpop.f32.mrb[0].mxu0
    %v829 = vadd.f32 0.0, %v828
    %v830 = vpop.f32.mrb[0].mxu0
    %831 = vdwg.mxu0
    %v832 = vadd.f32 %v758, %v829
    %v833 = vtanh.pop %v832
    %834 = vst.msk [vmem:[#allocation4 + $0x18] sm:$0xff] %vm599, %v833
    %835 = vst.msk [vmem:[#allocation4 + $0x20] sm:$0xff] %vm500, %v833
    %v836 = vld [vmem:[#allocation3 + $0x20] sm:$0xff]
    %v838 = vsel %vm489, %v833, 0
    %840 = vmatprep.subr.mxu0 0.0
    %841 = vmatpush1.msra.mxu0 %v515
    %842 = vmatprep.subr.mxu0 0.0
    %843 = vmatpush1.msra.mxu0 %v516
    %844 = vmatprep.subr.mxu0 0.0
    %845 = vmatpush1.msra.mxu0 %v517
    %846 = vmatprep.subr.mxu0 0.0
    %847 = vmatpush1.msra.mxu0 %v518
    %848 = vmatprep.subr.mxu0 0.0
    %849 = vmatpush1.msra.mxu0 %v519
    %850 = vmatprep.subr.mxu0 0.0
    %851 = vmatpush1.msra.mxu0 %v520
    %852 = vmatprep.subr.mxu0 0.0
    %853 = vmatpush1.msra.mxu0 %v521
    %854 = vmatprep.subr.mxu0 0.0
    %855 = vmatpush1.msra.mxu0 %v522
    %856 = vmatprep.subr.mxu0 0.0
    %857 = vmatpush1.msra.mxu0 0.0
    %858 = vmatprep.subr.mxu0 0.0
    %859 = vmatpush1.msra.mxu0 0.0
    %860 = vmatprep.subr.mxu0 0.0
    %861 = vmatpush1.msra.mxu0 0.0
    %862 = vmatprep.subr.mxu0 0.0
    %863 = vmatpush1.msra.mxu0 0.0
    %864 = vmatprep.subr.mxu0 0.0
    %865 = vmatpush1.msra.mxu0 0.0
    %866 = vmatprep.subr.mxu0 0.0
    %867 = vmatpush1.msra.mxu0 0.0
    %868 = vmatprep.subr.mxu0 0.0
    %869 = vmatpush1.msra.mxu0 0.0
    %870 = vmatprep.subr.mxu0 0.0
    %871 = vmatpush1.msra.mxu0 0.0
    %872 = vmatprep.subr.mxu0 0.0
    %873 = vmatpush1.msra.mxu0 0.0
    %874 = vmatprep.subr.mxu0 0.0
    %875 = vmatpush1.msra.mxu0 0.0
    %876 = vmatprep.subr.mxu0 0.0
    %877 = vmatpush1.msra.mxu0 0.0
    %878 = vmatprep.subr.mxu0 0.0
    %879 = vmatpush1.msra.mxu0 0.0
    %880 = vmatprep.subr.mxu0 0.0
    %881 = vmatpush1.msra.mxu0 0.0
    %882 = vmatprep.subr.mxu0 0.0
    %883 = vmatpush1.msra.mxu0 0.0
    %884 = vmatprep.subr.mxu0 0.0
    %885 = vmatpush1.msra.mxu0 0.0
    %886 = vmatprep.subr.mxu0 0.0
    %887 = vmatpush1.msra.mxu0 0.0
    %888 = vmatprep.subr.mxu0 0.0
    %889 = vmatpush1.msra.mxu0 0.0
    %890 = vmatprep.subr.mxu0 0.0
    %891 = vmatpush1.msra.mxu0 0.0
    %892 = vmatprep.subr.mxu0 0.0
    %893 = vmatpush1.msra.mxu0 0.0
    %894 = vmatprep.subr.mxu0 0.0
    %895 = vmatpush1.msra.mxu0 0.0
    %896 = vmatprep.subr.mxu0 0.0
    %897 = vmatpush1.msra.mxu0 0.0
    %898 = vmatprep.subr.mxu0 0.0
    %899 = vmatpush1.msra.mxu0 0.0
    %900 = vmatprep.subr.mxu0 0.0
    %901 = vmatpush1.msra.mxu0 0.0
    %902 = vmatprep.subr.mxu0 0.0
    %903 = vmatpush1.msra.mxu0 0.0
    %904 = vmatprep.mubr.f32.mxu0 0.0
    %905 = vmatmul.mubr.f32.gmra.mrb[0].mxu0 %v838
    %v906 = vpop.f32.mrb[0].mxu0
    %v907 = vadd.f32 0.0, %v906
    %v908 = vpop.f32.mrb[0].mxu0
    %909 = vdwg.mxu0
    %v910 = vadd.f32 %v836, %v907
    %v911 = vtanh.pop %v910
    %912 = vst.msk [vmem:[#allocation4 + $0x20] sm:$0xff] %vm599, %v911
    %913 = vst.msk [vmem:[#allocation4 + $0x18] sm:$0xff] %vm500, %v911
    %v914 = vld [vmem:[#allocation3 + $0x28] sm:$0xff]
    %v916 = vsel %vm489, %v911, 0
    %918 = vmatprep.subr.mxu0 0.0
    %919 = vmatpush1.msra.mxu0 %v515
    %920 = vmatprep.subr.mxu0 0.0
    %921 = vmatpush1.msra.mxu0 %v516
    %922 = vmatprep.subr.mxu0 0.0
    %923 = vmatpush1.msra.mxu0 %v517
    %924 = vmatprep.subr.mxu0 0.0
    %925 = vmatpush1.msra.mxu0 %v518
    %926 = vmatprep.subr.mxu0 0.0
    %927 = vmatpush1.msra.mxu0 %v519
    %928 = vmatprep.subr.mxu0 0.0
    %929 = vmatpush1.msra.mxu0 %v520
    %930 = vmatprep.subr.mxu0 0.0
    %931 = vmatpush1.msra.mxu0 %v521
    %932 = vmatprep.subr.mxu0 0.0
    %933 = vmatpush1.msra.mxu0 %v522
    %934 = vmatprep.subr.mxu0 0.0
    %935 = vmatpush1.msra.mxu0 0.0
    %936 = vmatprep.subr.mxu0 0.0
    %937 = vmatpush1.msra.mxu0 0.0
    %938 = vmatprep.subr.mxu0 0.0
    %939 = vmatpush1.msra.mxu0 0.0
    %940 = vmatprep.subr.mxu0 0.0
    %941 = vmatpush1.msra.mxu0 0.0
    %942 = vmatprep.subr.mxu0 0.0
    %943 = vmatpush1.msra.mxu0 0.0
    %944 = vmatprep.subr.mxu0 0.0
    %945 = vmatpush1.msra.mxu0 0.0
    %946 = vmatprep.subr.mxu0 0.0
    %947 = vmatpush1.msra.mxu0 0.0
    %948 = vmatprep.subr.mxu0 0.0
    %949 = vmatpush1.msra.mxu0 0.0
    %950 = vmatprep.subr.mxu0 0.0
    %951 = vmatpush1.msra.mxu0 0.0
    %952 = vmatprep.subr.mxu0 0.0
    %953 = vmatpush1.msra.mxu0 0.0
    %954 = vmatprep.subr.mxu0 0.0
    %955 = vmatpush1.msra.mxu0 0.0
    %956 = vmatprep.subr.mxu0 0.0
    %957 = vmatpush1.msra.mxu0 0.0
    %958 = vmatprep.subr.mxu0 0.0
    %959 = vmatpush1.msra.mxu0 0.0
    %960 = vmatprep.subr.mxu0 0.0
    %961 = vmatpush1.msra.mxu0 0.0
    %962 = vmatprep.subr.mxu0 0.0
    %963 = vmatpush1.msra.mxu0 0.0
    %964 = vmatprep.subr.mxu0 0.0
    %965 = vmatpush1.msra.mxu0 0.0
    %966 = vmatprep.subr.mxu0 0.0
    %967 = vmatpush1.msra.mxu0 0.0
    %968 = vmatprep.subr.mxu0 0.0
    %969 = vmatpush1.msra.mxu0 0.0
    %970 = vmatprep.subr.mxu0 0.0
    %971 = vmatpush1.msra.mxu0 0.0
    %972 = vmatprep.subr.mxu0 0.0
    %973 = vmatpush1.msra.mxu0 0.0
    %974 = vmatprep.subr.mxu0 0.0
    %975 = vmatpush1.msra.mxu0 0.0
    %976 = vmatprep.subr.mxu0 0.0
    %977 = vmatpush1.msra.mxu0 0.0
    %978 = vmatprep.subr.mxu0 0.0
    %979 = vmatpush1.msra.mxu0 0.0
    %980 = vmatprep.subr.mxu0 0.0
    %981 = vmatpush1.msra.mxu0 0.0
    %982 = vmatprep.mubr.f32.mxu0 0.0
    %983 = vmatmul.mubr.f32.gmra.mrb[0].mxu0 %v916
    %v984 = vpop.f32.mrb[0].mxu0
    %v985 = vadd.f32 0.0, %v984
    %v986 = vpop.f32.mrb[0].mxu0
    %987 = vdwg.mxu0
    %v988 = vadd.f32 %v914, %v985
    %v989 = vtanh.pop %v988
    %990 = vst.msk [vmem:[#allocation4 + $0x28] sm:$0xff] %vm599, %v989
    %991 = vst.msk [vmem:[#allocation4 + $0x10] sm:$0xff] %vm500, %v989
    %v992 = vld [vmem:[#allocation3 + $0x30] sm:$0xff]
    %v994 = vsel %vm489, %v989, 0
    %996 = vmatprep.subr.mxu0 0.0
    %997 = vmatpush1.msra.mxu0 %v515
    %998 = vmatprep.subr.mxu0 0.0
    %999 = vmatpush1.msra.mxu0 %v516
    %1000 = vmatprep.subr.mxu0 0.0
    %1001 = vmatpush1.msra.mxu0 %v517
    %1002 = vmatprep.subr.mxu0 0.0
    %1003 = vmatpush1.msra.mxu0 %v518
    %1004 = vmatprep.subr.mxu0 0.0
    %1005 = vmatpush1.msra.mxu0 %v519
    %1006 = vmatprep.subr.mxu0 0.0
    %1007 = vmatpush1.msra.mxu0 %v520
    %1008 = vmatprep.subr.mxu0 0.0
    %1009 = vmatpush1.msra.mxu0 %v521
    %1010 = vmatprep.subr.mxu0 0.0
    %1011 = vmatpush1.msra.mxu0 %v522
    %1012 = vmatprep.subr.mxu0 0.0
    %1013 = vmatpush1.msra.mxu0 0.0
    %1014 = vmatprep.subr.mxu0 0.0
    %1015 = vmatpush1.msra.mxu0 0.0
    %1016 = vmatprep.subr.mxu0 0.0
    %1017 = vmatpush1.msra.mxu0 0.0
    %1018 = vmatprep.subr.mxu0 0.0
    %1019 = vmatpush1.msra.mxu0 0.0
    %1020 = vmatprep.subr.mxu0 0.0
    %1021 = vmatpush1.msra.mxu0 0.0
    %1022 = vmatprep.subr.mxu0 0.0
    %1023 = vmatpush1.msra.mxu0 0.0
    %1024 = vmatprep.subr.mxu0 0.0
    %1025 = vmatpush1.msra.mxu0 0.0
    %1026 = vmatprep.subr.mxu0 0.0
    %1027 = vmatpush1.msra.mxu0 0.0
    %1028 = vmatprep.subr.mxu0 0.0
    %1029 = vmatpush1.msra.mxu0 0.0
    %1030 = vmatprep.subr.mxu0 0.0
    %1031 = vmatpush1.msra.mxu0 0.0
    %1032 = vmatprep.subr.mxu0 0.0
    %1033 = vmatpush1.msra.mxu0 0.0
    %1034 = vmatprep.subr.mxu0 0.0
    %1035 = vmatpush1.msra.mxu0 0.0
    %1036 = vmatprep.subr.mxu0 0.0
    %1037 = vmatpush1.msra.mxu0 0.0
    %1038 = vmatprep.subr.mxu0 0.0
    %1039 = vmatpush1.msra.mxu0 0.0
    %1040 = vmatprep.subr.mxu0 0.0
    %1041 = vmatpush1.msra.mxu0 0.0
    %1042 = vmatprep.subr.mxu0 0.0
    %1043 = vmatpush1.msra.mxu0 0.0
    %1044 = vmatprep.subr.mxu0 0.0
    %1045 = vmatpush1.msra.mxu0 0.0
    %1046 = vmatprep.subr.mxu0 0.0
    %1047 = vmatpush1.msra.mxu0 0.0
    %1048 = vmatprep.subr.mxu0 0.0
    %1049 = vmatpush1.msra.mxu0 0.0
    %1050 = vmatprep.subr.mxu0 0.0
    %1051 = vmatpush1.msra.mxu0 0.0
    %1052 = vmatprep.subr.mxu0 0.0
    %1053 = vmatpush1.msra.mxu0 0.0
    %1054 = vmatprep.subr.mxu0 0.0
    %1055 = vmatpush1.msra.mxu0 0.0
    %1056 = vmatprep.subr.mxu0 0.0
    %1057 = vmatpush1.msra.mxu0 0.0
    %1058 = vmatprep.subr.mxu0 0.0
    %1059 = vmatpush1.msra.mxu0 0.0
    %1060 = vmatprep.mubr.f32.mxu0 0.0
    %1061 = vmatmul.mubr.f32.gmra.mrb[0].mxu0 %v994
    %v1062 = vpop.f32.mrb[0].mxu0
    %v1063 = vadd.f32 0.0, %v1062
    %v1064 = vpop.f32.mrb[0].mxu0
    %1065 = vdwg.mxu0
    %v1066 = vadd.f32 %v992, %v1063
    %v1067 = vtanh.pop %v1066
    %1068 = vst.msk [vmem:[#allocation4 + $0x30] sm:$0xff] %vm599, %v1067
    %1069 = vst.msk [vmem:[#allocation4 + $0x8] sm:$0xff] %vm500, %v1067
    %v1070 = vld [vmem:[#allocation3 + $0x38] sm:$0xff]
    %v1072 = vsel %vm489, %v1067, 0
    %1074 = vmatprep.subr.mxu0 0.0
    %1075 = vmatpush1.msra.mxu0 %v515
    %1076 = vmatprep.subr.mxu0 0.0
    %1077 = vmatpush1.msra.mxu0 %v516
    %1078 = vmatprep.subr.mxu0 0.0
    %1079 = vmatpush1.msra.mxu0 %v517
    %1080 = vmatprep.subr.mxu0 0.0
    %1081 = vmatpush1.msra.mxu0 %v518
    %1082 = vmatprep.subr.mxu0 0.0
    %1083 = vmatpush1.msra.mxu0 %v519
    %1084 = vmatprep.subr.mxu0 0.0
    %1085 = vmatpush1.msra.mxu0 %v520
    %1086 = vmatprep.subr.mxu0 0.0
    %1087 = vmatpush1.msra.mxu0 %v521
    %1088 = vmatprep.subr.mxu0 0.0
    %1089 = vmatpush1.msra.mxu0 %v522
    %1090 = vmatprep.subr.mxu0 0.0
    %1091 = vmatpush1.msra.mxu0 0.0
    %1092 = vmatprep.subr.mxu0 0.0
    %1093 = vmatpush1.msra.mxu0 0.0
    %1094 = vmatprep.subr.mxu0 0.0
    %1095 = vmatpush1.msra.mxu0 0.0
    %1096 = vmatprep.subr.mxu0 0.0
    %1097 = vmatpush1.msra.mxu0 0.0
    %1098 = vmatprep.subr.mxu0 0.0
    %1099 = vmatpush1.msra.mxu0 0.0
    %1100 = vmatprep.subr.mxu0 0.0
    %1101 = vmatpush1.msra.mxu0 0.0
    %1102 = vmatprep.subr.mxu0 0.0
    %1103 = vmatpush1.msra.mxu0 0.0
    %1104 = vmatprep.subr.mxu0 0.0
    %1105 = vmatpush1.msra.mxu0 0.0
    %1106 = vmatprep.subr.mxu0 0.0
    %1107 = vmatpush1.msra.mxu0 0.0
    %1108 = vmatprep.subr.mxu0 0.0
    %1109 = vmatpush1.msra.mxu0 0.0
    %1110 = vmatprep.subr.mxu0 0.0
    %1111 = vmatpush1.msra.mxu0 0.0
    %1112 = vmatprep.subr.mxu0 0.0
    %1113 = vmatpush1.msra.mxu0 0.0
    %1114 = vmatprep.subr.mxu0 0.0
    %1115 = vmatpush1.msra.mxu0 0.0
    %1116 = vmatprep.subr.mxu0 0.0
    %1117 = vmatpush1.msra.mxu0 0.0
    %1118 = vmatprep.subr.mxu0 0.0
    %1119 = vmatpush1.msra.mxu0 0.0
    %1120 = vmatprep.subr.mxu0 0.0
    %1121 = vmatpush1.msra.mxu0 0.0
    %1122 = vmatprep.subr.mxu0 0.0
    %1123 = vmatpush1.msra.mxu0 0.0
    %1124 = vmatprep.subr.mxu0 0.0
    %1125 = vmatpush1.msra.mxu0 0.0
    %1126 = vmatprep.subr.mxu0 0.0
    %1127 = vmatpush1.msra.mxu0 0.0
    %1128 = vmatprep.subr.mxu0 0.0
    %1129 = vmatpush1.msra.mxu0 0.0
    %1130 = vmatprep.subr.mxu0 0.0
    %1131 = vmatpush1.msra.mxu0 0.0
    %1132 = vmatprep.subr.mxu0 0.0
    %1133 = vmatpush1.msra.mxu0 0.0
    %1134 = vmatprep.subr.mxu0 0.0
    %1135 = vmatpush1.msra.mxu0 0.0
    %1136 = vmatprep.subr.mxu0 0.0
    %1137 = vmatpush1.msra.mxu0 0.0
    %1138 = vmatprep.mubr.f32.mxu0 0.0
    %1139 = vmatmul.mubr.f32.gmra.mrb[0].mxu0 %v1072
    %v1140 = vpop.f32.mrb[0].mxu0
    %v1141 = vadd.f32 0.0, %v1140
    %v1142 = vpop.f32.mrb[0].mxu0
    %1143 = vdwg.mxu0
    %v1144 = vadd.f32 %v1070, %v1141
    %v1145 = vtanh.pop %v1144
    %1146 = vst.msk [vmem:[#allocation4 + $0x38] sm:$0xff] %vm599, %v1145
    %1147 = vst.msk [vmem:[#allocation4] sm:$0xff] %vm500, %v1145
    %v1148 = vld [vmem:[#allocation4] sm:$0xff]
    %v1149 = vld [vmem:[#allocation4 + $0x8] sm:$0xff]
    %v1150 = vld [vmem:[#allocation4 + $0x10] sm:$0xff]
    %v1151 = vld [vmem:[#allocation4 + $0x18] sm:$0xff]
    %v1152 = vld [vmem:[#allocation4 + $0x20] sm:$0xff]
    %v1153 = vld [vmem:[#allocation4 + $0x28] sm:$0xff]
    %v1154 = vld [vmem:[#allocation4 + $0x30] sm:$0xff]
    %v1155 = vld [vmem:[#allocation4 + $0x38] sm:$0xff]
    %v1156 = vld [vmem:[#allocation7] sm:$0xff]
    %v1157 = vld [vmem:[#allocation7 + $0x8] sm:$0xff]
    %v1158 = vld [vmem:[#allocation7 + $0x10] sm:$0xff]
    %v1159 = vld [vmem:[#allocation7 + $0x18] sm:$0xff]
    %v1160 = vld [vmem:[#allocation7 + $0x20] sm:$0xff]
    %v1161 = vld [vmem:[#allocation7 + $0x28] sm:$0xff]
    %v1162 = vld [vmem:[#allocation7 + $0x30] sm:$0xff]
    %v1163 = vld [vmem:[#allocation7 + $0x38] sm:$0xff]
    %v1164 = vld [vmem:[%s6] sm:$0x1]
    %v1166 = vlaneseq
    %v1167 = vshrl.u32 %v1166, 7
    %v1168 = vsub.s32 0, %v1167
    %v1169 = vrot.slane %v1164, %v1168
    %v1172 = vsel %vm489, %v1148, 0
    %v1175 = vsel %vm489, %v1149, 0
    %v1178 = vsel %vm489, %v1150, 0
    %v1181 = vsel %vm489, %v1151, 0
    %v1184 = vsel %vm489, %v1152, 0
    %v1187 = vsel %vm489, %v1153, 0
    %v1190 = vsel %vm489, %v1154, 0
    %v1193 = vsel %vm489, %v1155, 0
    %1195 = vmatprep.subr.mxu0 0.0
    %1196 = vmatpush1.msra.mxu0 %v1156
    %1197 = vmatprep.subr.mxu0 0.0
    %1198 = vmatpush1.msra.mxu0 %v1157
    %1199 = vmatprep.subr.mxu0 0.0
    %1200 = vmatpush1.msra.mxu0 %v1158
    %1201 = vmatprep.subr.mxu0 0.0
    %1202 = vmatpush1.msra.mxu0 %v1159
    %1203 = vmatprep.subr.mxu0 0.0
    %1204 = vmatpush1.msra.mxu0 %v1160
    %1205 = vmatprep.subr.mxu0 0.0
    %1206 = vmatpush1.msra.mxu0 %v1161
    %1207 = vmatprep.subr.mxu0 0.0
    %1208 = vmatpush1.msra.mxu0 %v1162
    %1209 = vmatprep.subr.mxu0 0.0
    %1210 = vmatpush1.msra.mxu0 %v1163
    %1211 = vmatprep.subr.mxu0 0.0
    %1212 = vmatpush1.msra.mxu0 0.0
    %1213 = vmatprep.subr.mxu0 0.0
    %1214 = vmatpush1.msra.mxu0 0.0
    %1215 = vmatprep.subr.mxu0 0.0
    %1216 = vmatpush1.msra.mxu0 0.0
    %1217 = vmatprep.subr.mxu0 0.0
    %1218 = vmatpush1.msra.mxu0 0.0
    %1219 = vmatprep.subr.mxu0 0.0
    %1220 = vmatpush1.msra.mxu0 0.0
    %1221 = vmatprep.subr.mxu0 0.0
    %1222 = vmatpush1.msra.mxu0 0.0
    %1223 = vmatprep.subr.mxu0 0.0
    %1224 = vmatpush1.msra.mxu0 0.0
    %1225 = vmatprep.subr.mxu0 0.0
    %1226 = vmatpush1.msra.mxu0 0.0
    %1227 = vmatprep.subr.mxu0 0.0
    %1228 = vmatpush1.msra.mxu0 0.0
    %1229 = vmatprep.subr.mxu0 0.0
    %1230 = vmatpush1.msra.mxu0 0.0
    %1231 = vmatprep.subr.mxu0 0.0
    %1232 = vmatpush1.msra.mxu0 0.0
    %1233 = vmatprep.subr.mxu0 0.0
    %1234 = vmatpush1.msra.mxu0 0.0
    %1235 = vmatprep.subr.mxu0 0.0
    %1236 = vmatpush1.msra.mxu0 0.0
    %1237 = vmatprep.subr.mxu0 0.0
    %1238 = vmatpush1.msra.mxu0 0.0
    %1239 = vmatprep.subr.mxu0 0.0
    %1240 = vmatpush1.msra.mxu0 0.0
    %1241 = vmatprep.subr.mxu0 0.0
    %1242 = vmatpush1.msra.mxu0 0.0
    %1243 = vmatprep.subr.mxu0 0.0
    %1244 = vmatpush1.msra.mxu0 0.0
    %1245 = vmatprep.subr.mxu0 0.0
    %1246 = vmatpush1.msra.mxu0 0.0
    %1247 = vmatprep.subr.mxu0 0.0
    %1248 = vmatpush1.msra.mxu0 0.0
    %1249 = vmatprep.subr.mxu0 0.0
    %1250 = vmatpush1.msra.mxu0 0.0
    %1251 = vmatprep.subr.mxu0 0.0
    %1252 = vmatpush1.msra.mxu0 0.0
    %1253 = vmatprep.subr.mxu0 0.0
    %1254 = vmatpush1.msra.mxu0 0.0
    %1255 = vmatprep.subr.mxu0 0.0
    %1256 = vmatpush1.msra.mxu0 0.0
    %1257 = vmatprep.subr.mxu0 0.0
    %1258 = vmatpush1.msra.mxu0 0.0
    %1259 = vmatprep.mubr.f32.mxu0 0.0
    %1260 = vmatmul.mubr.f32.gmra.mrb[0].mxu0 %v1172
    %v1261 = vpop.f32.mrb[0].mxu0
    %v1262 = vadd.f32 %v1169, %v1261
    %v1263 = vpop.f32.mrb[0].mxu0
    %1264 = vmatprep.mubr.f32.mxu0 0.0
    %1265 = vmatmul.mubr.f32.gmra.mrb[0].mxu0 %v1175
    %v1266 = vpop.f32.mrb[0].mxu0
    %v1267 = vadd.f32 %v1169, %v1266
    %v1268 = vpop.f32.mrb[0].mxu0
    %1269 = vmatprep.mubr.f32.mxu0 0.0
    %1270 = vmatmul.mubr.f32.gmra.mrb[0].mxu0 %v1178
    %v1271 = vpop.f32.mrb[0].mxu0
    %v1272 = vadd.f32 %v1169, %v1271
    %v1273 = vpop.f32.mrb[0].mxu0
    %1274 = vmatprep.mubr.f32.mxu0 0.0
    %1275 = vmatmul.mubr.f32.gmra.mrb[0].mxu0 %v1181
    %v1276 = vpop.f32.mrb[0].mxu0
    %v1277 = vadd.f32 %v1169, %v1276
    %v1278 = vpop.f32.mrb[0].mxu0
    %1279 = vmatprep.mubr.f32.mxu0 0.0
    %1280 = vmatmul.mubr.f32.gmra.mrb[0].mxu0 %v1184
    %v1281 = vpop.f32.mrb[0].mxu0
    %v1282 = vadd.f32 %v1169, %v1281
    %v1283 = vpop.f32.mrb[0].mxu0
    %1284 = vmatprep.mubr.f32.mxu0 0.0
    %1285 = vmatmul.mubr.f32.gmra.mrb[0].mxu0 %v1187
    %v1286 = vpop.f32.mrb[0].mxu0
    %v1287 = vadd.f32 %v1169, %v1286
    %v1288 = vpop.f32.mrb[0].mxu0
    %1289 = vmatprep.mubr.f32.mxu0 0.0
    %1290 = vmatmul.mubr.f32.gmra.mrb[0].mxu0 %v1190
    %v1291 = vpop.f32.mrb[0].mxu0
    %v1292 = vadd.f32 %v1169, %v1291
    %v1293 = vpop.f32.mrb[0].mxu0
    %1294 = vmatprep.mubr.f32.mxu0 0.0
    %1295 = vmatmul.mubr.f32.gmra.mrb[0].mxu0 %v1193
    %v1296 = vpop.f32.mrb[0].mxu0
    %v1297 = vadd.f32 %v1169, %v1296
    %v1298 = vpop.f32.mrb[0].mxu0
    %1299 = vdwg.mxu0
    %1300 = vst.msk [vmem:[#allocation3] sm:$0xff] %vm489, %v1262
    %1301 = vst.msk [vmem:[#allocation3 + $0x8] sm:$0xff] %vm489, %v1267
    %1302 = vst.msk [vmem:[#allocation3 + $0x10] sm:$0xff] %vm489, %v1272
    %1303 = vst.msk [vmem:[#allocation3 + $0x18] sm:$0xff] %vm489, %v1277
    %1304 = vst.msk [vmem:[#allocation3 + $0x20] sm:$0xff] %vm489, %v1282
    %1305 = vst.msk [vmem:[#allocation3 + $0x28] sm:$0xff] %vm489, %v1287
    %1306 = vst.msk [vmem:[#allocation3 + $0x30] sm:$0xff] %vm489, %v1292
    %1307 = vst.msk [vmem:[#allocation3 + $0x38] sm:$0xff] %vm489, %v1297
    %v1308 = vld [vmem:[#allocation3] sm:$0xff]
    %v1309 = vld [vmem:[#allocation3 + $0x38] sm:$0xff]
    %1310 = vst.msk [vmem:[#allocation3] sm:$0xff] %vm500, %v1309
    %1311 = vst.msk [vmem:[#allocation3 + $0x38] sm:$0xff] %vm500, %v1308
    %v1312 = vld [vmem:[#allocation3 + $0x8] sm:$0xff]
    %v1313 = vld [vmem:[#allocation3 + $0x30] sm:$0xff]
    %1314 = vst.msk [vmem:[#allocation3 + $0x8] sm:$0xff] %vm500, %v1313
    %1315 = vst.msk [vmem:[#allocation3 + $0x30] sm:$0xff] %vm500, %v1312
    %v1316 = vld [vmem:[#allocation3 + $0x10] sm:$0xff]
    %v1317 = vld [vmem:[#allocation3 + $0x28] sm:$0xff]
    %1318 = vst.msk [vmem:[#allocation3 + $0x10] sm:$0xff] %vm500, %v1317
    %1319 = vst.msk [vmem:[#allocation3 + $0x28] sm:$0xff] %vm500, %v1316
    %v1320 = vld [vmem:[#allocation3 + $0x18] sm:$0xff]
    %v1321 = vld [vmem:[#allocation3 + $0x20] sm:$0xff]
    %1322 = vst.msk [vmem:[#allocation3 + $0x18] sm:$0xff] %vm500, %v1321
    %1323 = vst.msk [vmem:[#allocation3 + $0x20] sm:$0xff] %vm500, %v1320
    %v1324 = vld [vmem:[#allocation9] sm:$0xff]
    %v1325 = vld [vmem:[#allocation9 + $0x8] sm:$0xff]
    %v1326 = vld [vmem:[#allocation9 + $0x10] sm:$0xff]
    %v1327 = vld [vmem:[#allocation9 + $0x18] sm:$0xff]
    %v1328 = vld [vmem:[#allocation9 + $0x20] sm:$0xff]
    %v1329 = vld [vmem:[#allocation9 + $0x28] sm:$0xff]
    %v1330 = vld [vmem:[#allocation9 + $0x30] sm:$0xff]
    %v1331 = vld [vmem:[#allocation9 + $0x38] sm:$0xff]
    %v1332 = vld [vmem:[#allocation3] sm:$0xff]
    %1333 = vmatprep.subr.mxu0 0.0
    %1334 = vmatpush1.msra.mxu0 %v1324
    %1335 = vmatprep.subr.mxu0 0.0
    %1336 = vmatpush1.msra.mxu0 %v1325
    %1337 = vmatprep.subr.mxu0 0.0
    %1338 = vmatpush1.msra.mxu0 %v1326
    %1339 = vmatprep.subr.mxu0 0.0
    %1340 = vmatpush1.msra.mxu0 %v1327
    %1341 = vmatprep.subr.mxu0 0.0
    %1342 = vmatpush1.msra.mxu0 %v1328
    %1343 = vmatprep.subr.mxu0 0.0
    %1344 = vmatpush1.msra.mxu0 %v1329
    %1345 = vmatprep.subr.mxu0 0.0
    %1346 = vmatpush1.msra.mxu0 %v1330
    %1347 = vmatprep.subr.mxu0 0.0
    %1348 = vmatpush1.msra.mxu0 %v1331
    %1349 = vmatprep.subr.mxu0 0.0
    %1350 = vmatpush1.msra.mxu0 0.0
    %1351 = vmatprep.subr.mxu0 0.0
    %1352 = vmatpush1.msra.mxu0 0.0
    %1353 = vmatprep.subr.mxu0 0.0
    %1354 = vmatpush1.msra.mxu0 0.0
    %1355 = vmatprep.subr.mxu0 0.0
    %1356 = vmatpush1.msra.mxu0 0.0
    %1357 = vmatprep.subr.mxu0 0.0
    %1358 = vmatpush1.msra.mxu0 0.0
    %1359 = vmatprep.subr.mxu0 0.0
    %1360 = vmatpush1.msra.mxu0 0.0
    %1361 = vmatprep.subr.mxu0 0.0
    %1362 = vmatpush1.msra.mxu0 0.0
    %1363 = vmatprep.subr.mxu0 0.0
    %1364 = vmatpush1.msra.mxu0 0.0
    %1365 = vmatprep.subr.mxu0 0.0
    %1366 = vmatpush1.msra.mxu0 0.0
    %1367 = vmatprep.subr.mxu0 0.0
    %1368 = vmatpush1.msra.mxu0 0.0
    %1369 = vmatprep.subr.mxu0 0.0
    %1370 = vmatpush1.msra.mxu0 0.0
    %1371 = vmatprep.subr.mxu0 0.0
    %1372 = vmatpush1.msra.mxu0 0.0
    %1373 = vmatprep.subr.mxu0 0.0
    %1374 = vmatpush1.msra.mxu0 0.0
    %1375 = vmatprep.subr.mxu0 0.0
    %1376 = vmatpush1.msra.mxu0 0.0
    %1377 = vmatprep.subr.mxu0 0.0
    %1378 = vmatpush1.msra.mxu0 0.0
    %1379 = vmatprep.subr.mxu0 0.0
    %1380 = vmatpush1.msra.mxu0 0.0
    %1381 = vmatprep.subr.mxu0 0.0
    %1382 = vmatpush1.msra.mxu0 0.0
    %1383 = vmatprep.subr.mxu0 0.0
    %1384 = vmatpush1.msra.mxu0 0.0
    %1385 = vmatprep.subr.mxu0 0.0
    %1386 = vmatpush1.msra.mxu0 0.0
    %1387 = vmatprep.subr.mxu0 0.0
    %1388 = vmatpush1.msra.mxu0 0.0
    %1389 = vmatprep.subr.mxu0 0.0
    %1390 = vmatpush1.msra.mxu0 0.0
    %1391 = vmatprep.subr.mxu0 0.0
    %1392 = vmatpush1.msra.mxu0 0.0
    %1393 = vmatprep.subr.mxu0 0.0
    %1394 = vmatpush1.msra.mxu0 0.0
    %1395 = vmatprep.subr.mxu0 0.0
    %1396 = vmatpush1.msra.mxu0 0.0
    %1397 = vmatprep.mubr.f32.mxu0 0.0
    %1398 = vmatmul.mubr.f32.gmra.mrb[0].mxu0 %v525
    %v1399 = vpop.f32.mrb[0].mxu0
    %v1400 = vadd.f32 0.0, %v1399
    %v1401 = vpop.f32.mrb[0].mxu0
    %1402 = vdwg.mxu0
    %v1403 = vadd.f32 %v1332, %v1400
    %v1404 = vtanh.pop %v1403
    %1405 = vst.msk [vmem:[#allocation4] sm:$0xff] %vm599, %v1404
    %1406 = vst.msk [vmem:[#allocation4 + $0x38] sm:$0xff] %vm500, %v1404
    %v1407 = vld [vmem:[#allocation3 + $0x8] sm:$0xff]
    %v1409 = vsel %vm489, %v1404, 0
    %1411 = vmatprep.subr.mxu0 0.0
    %1412 = vmatpush1.msra.mxu0 %v1324
    %1413 = vmatprep.subr.mxu0 0.0
    %1414 = vmatpush1.msra.mxu0 %v1325
    %1415 = vmatprep.subr.mxu0 0.0
    %1416 = vmatpush1.msra.mxu0 %v1326
    %1417 = vmatprep.subr.mxu0 0.0
    %1418 = vmatpush1.msra.mxu0 %v1327
    %1419 = vmatprep.subr.mxu0 0.0
    %1420 = vmatpush1.msra.mxu0 %v1328
    %1421 = vmatprep.subr.mxu0 0.0
    %1422 = vmatpush1.msra.mxu0 %v1329
    %1423 = vmatprep.subr.mxu0 0.0
    %1424 = vmatpush1.msra.mxu0 %v1330
    %1425 = vmatprep.subr.mxu0 0.0
    %1426 = vmatpush1.msra.mxu0 %v1331
    %1427 = vmatprep.subr.mxu0 0.0
    %1428 = vmatpush1.msra.mxu0 0.0
    %1429 = vmatprep.subr.mxu0 0.0
    %1430 = vmatpush1.msra.mxu0 0.0
    %1431 = vmatprep.subr.mxu0 0.0
    %1432 = vmatpush1.msra.mxu0 0.0
    %1433 = vmatprep.subr.mxu0 0.0
    %1434 = vmatpush1.msra.mxu0 0.0
    %1435 = vmatprep.subr.mxu0 0.0
    %1436 = vmatpush1.msra.mxu0 0.0
    %1437 = vmatprep.subr.mxu0 0.0
    %1438 = vmatpush1.msra.mxu0 0.0
    %1439 = vmatprep.subr.mxu0 0.0
    %1440 = vmatpush1.msra.mxu0 0.0
    %1441 = vmatprep.subr.mxu0 0.0
    %1442 = vmatpush1.msra.mxu0 0.0
    %1443 = vmatprep.subr.mxu0 0.0
    %1444 = vmatpush1.msra.mxu0 0.0
    %1445 = vmatprep.subr.mxu0 0.0
    %1446 = vmatpush1.msra.mxu0 0.0
    %1447 = vmatprep.subr.mxu0 0.0
    %1448 = vmatpush1.msra.mxu0 0.0
    %1449 = vmatprep.subr.mxu0 0.0
    %1450 = vmatpush1.msra.mxu0 0.0
    %1451 = vmatprep.subr.mxu0 0.0
    %1452 = vmatpush1.msra.mxu0 0.0
    %1453 = vmatprep.subr.mxu0 0.0
    %1454 = vmatpush1.msra.mxu0 0.0
    %1455 = vmatprep.subr.mxu0 0.0
    %1456 = vmatpush1.msra.mxu0 0.0
    %1457 = vmatprep.subr.mxu0 0.0
    %1458 = vmatpush1.msra.mxu0 0.0
    %1459 = vmatprep.subr.mxu0 0.0
    %1460 = vmatpush1.msra.mxu0 0.0
    %1461 = vmatprep.subr.mxu0 0.0
    %1462 = vmatpush1.msra.mxu0 0.0
    %1463 = vmatprep.subr.mxu0 0.0
    %1464 = vmatpush1.msra.mxu0 0.0
    %1465 = vmatprep.subr.mxu0 0.0
    %1466 = vmatpush1.msra.mxu0 0.0
    %1467 = vmatprep.subr.mxu0 0.0
    %1468 = vmatpush1.msra.mxu0 0.0
    %1469 = vmatprep.subr.mxu0 0.0
    %1470 = vmatpush1.msra.mxu0 0.0
    %1471 = vmatprep.subr.mxu0 0.0
    %1472 = vmatpush1.msra.mxu0 0.0
    %1473 = vmatprep.subr.mxu0 0.0
    %1474 = vmatpush1.msra.mxu0 0.0
    %1475 = vmatprep.mubr.f32.mxu0 0.0
    %1476 = vmatmul.mubr.f32.gmra.mrb[0].mxu0 %v1409
    %v1477 = vpop.f32.mrb[0].mxu0
    %v1478 = vadd.f32 0.0, %v1477
    %v1479 = vpop.f32.mrb[0].mxu0
    %1480 = vdwg.mxu0
    %v1481 = vadd.f32 %v1407, %v1478
    %v1482 = vtanh.pop %v1481
    %1483 = vst.msk [vmem:[#allocation4 + $0x8] sm:$0xff] %vm599, %v1482
    %1484 = vst.msk [vmem:[#allocation4 + $0x30] sm:$0xff] %vm500, %v1482
    %v1485 = vld [vmem:[#allocation3 + $0x10] sm:$0xff]
    %v1487 = vsel %vm489, %v1482, 0
    %1489 = vmatprep.subr.mxu0 0.0
    %1490 = vmatpush1.msra.mxu0 %v1324
    %1491 = vmatprep.subr.mxu0 0.0
    %1492 = vmatpush1.msra.mxu0 %v1325
    %1493 = vmatprep.subr.mxu0 0.0
    %1494 = vmatpush1.msra.mxu0 %v1326
    %1495 = vmatprep.subr.mxu0 0.0
    %1496 = vmatpush1.msra.mxu0 %v1327
    %1497 = vmatprep.subr.mxu0 0.0
    %1498 = vmatpush1.msra.mxu0 %v1328
    %1499 = vmatprep.subr.mxu0 0.0
    %1500 = vmatpush1.msra.mxu0 %v1329
    %1501 = vmatprep.subr.mxu0 0.0
    %1502 = vmatpush1.msra.mxu0 %v1330
    %1503 = vmatprep.subr.mxu0 0.0
    %1504 = vmatpush1.msra.mxu0 %v1331
    %1505 = vmatprep.subr.mxu0 0.0
    %1506 = vmatpush1.msra.mxu0 0.0
    %1507 = vmatprep.subr.mxu0 0.0
    %1508 = vmatpush1.msra.mxu0 0.0
    %1509 = vmatprep.subr.mxu0 0.0
    %1510 = vmatpush1.msra.mxu0 0.0
    %1511 = vmatprep.subr.mxu0 0.0
    %1512 = vmatpush1.msra.mxu0 0.0
    %1513 = vmatprep.subr.mxu0 0.0
    %1514 = vmatpush1.msra.mxu0 0.0
    %1515 = vmatprep.subr.mxu0 0.0
    %1516 = vmatpush1.msra.mxu0 0.0
    %1517 = vmatprep.subr.mxu0 0.0
    %1518 = vmatpush1.msra.mxu0 0.0
    %1519 = vmatprep.subr.mxu0 0.0
    %1520 = vmatpush1.msra.mxu0 0.0
    %1521 = vmatprep.subr.mxu0 0.0
    %1522 = vmatpush1.msra.mxu0 0.0
    %1523 = vmatprep.subr.mxu0 0.0
    %1524 = vmatpush1.msra.mxu0 0.0
    %1525 = vmatprep.subr.mxu0 0.0
    %1526 = vmatpush1.msra.mxu0 0.0
    %1527 = vmatprep.subr.mxu0 0.0
    %1528 = vmatpush1.msra.mxu0 0.0
    %1529 = vmatprep.subr.mxu0 0.0
    %1530 = vmatpush1.msra.mxu0 0.0
    %1531 = vmatprep.subr.mxu0 0.0
    %1532 = vmatpush1.msra.mxu0 0.0
    %1533 = vmatprep.subr.mxu0 0.0
    %1534 = vmatpush1.msra.mxu0 0.0
    %1535 = vmatprep.subr.mxu0 0.0
    %1536 = vmatpush1.msra.mxu0 0.0
    %1537 = vmatprep.subr.mxu0 0.0
    %1538 = vmatpush1.msra.mxu0 0.0
    %1539 = vmatprep.subr.mxu0 0.0
    %1540 = vmatpush1.msra.mxu0 0.0
    %1541 = vmatprep.subr.mxu0 0.0
    %1542 = vmatpush1.msra.mxu0 0.0
    %1543 = vmatprep.subr.mxu0 0.0
    %1544 = vmatpush1.msra.mxu0 0.0
    %1545 = vmatprep.subr.mxu0 0.0
    %1546 = vmatpush1.msra.mxu0 0.0
    %1547 = vmatprep.subr.mxu0 0.0
    %1548 = vmatpush1.msra.mxu0 0.0
    %1549 = vmatprep.subr.mxu0 0.0
    %1550 = vmatpush1.msra.mxu0 0.0
    %1551 = vmatprep.subr.mxu0 0.0
    %1552 = vmatpush1.msra.mxu0 0.0
    %1553 = vmatprep.mubr.f32.mxu0 0.0
    %1554 = vmatmul.mubr.f32.gmra.mrb[0].mxu0 %v1487
    %v1555 = vpop.f32.mrb[0].mxu0
    %v1556 = vadd.f32 0.0, %v1555
    %v1557 = vpop.f32.mrb[0].mxu0
    %1558 = vdwg.mxu0
    %v1559 = vadd.f32 %v1485, %v1556
    %v1560 = vtanh.pop %v1559
    %1561 = vst.msk [vmem:[#allocation4 + $0x10] sm:$0xff] %vm599, %v1560
    %1562 = vst.msk [vmem:[#allocation4 + $0x28] sm:$0xff] %vm500, %v1560
    %v1563 = vld [vmem:[#allocation3 + $0x18] sm:$0xff]
    %v1565 = vsel %vm489, %v1560, 0
    %1567 = vmatprep.subr.mxu0 0.0
    %1568 = vmatpush1.msra.mxu0 %v1324
    %1569 = vmatprep.subr.mxu0 0.0
    %1570 = vmatpush1.msra.mxu0 %v1325
    %1571 = vmatprep.subr.mxu0 0.0
    %1572 = vmatpush1.msra.mxu0 %v1326
    %1573 = vmatprep.subr.mxu0 0.0
    %1574 = vmatpush1.msra.mxu0 %v1327
    %1575 = vmatprep.subr.mxu0 0.0
    %1576 = vmatpush1.msra.mxu0 %v1328
    %1577 = vmatprep.subr.mxu0 0.0
    %1578 = vmatpush1.msra.mxu0 %v1329
    %1579 = vmatprep.subr.mxu0 0.0
    %1580 = vmatpush1.msra.mxu0 %v1330
    %1581 = vmatprep.subr.mxu0 0.0
    %1582 = vmatpush1.msra.mxu0 %v1331
    %1583 = vmatprep.subr.mxu0 0.0
    %1584 = vmatpush1.msra.mxu0 0.0
    %1585 = vmatprep.subr.mxu0 0.0
    %1586 = vmatpush1.msra.mxu0 0.0
    %1587 = vmatprep.subr.mxu0 0.0
    %1588 = vmatpush1.msra.mxu0 0.0
    %1589 = vmatprep.subr.mxu0 0.0
    %1590 = vmatpush1.msra.mxu0 0.0
    %1591 = vmatprep.subr.mxu0 0.0
    %1592 = vmatpush1.msra.mxu0 0.0
    %1593 = vmatprep.subr.mxu0 0.0
    %1594 = vmatpush1.msra.mxu0 0.0
    %1595 = vmatprep.subr.mxu0 0.0
    %1596 = vmatpush1.msra.mxu0 0.0
    %1597 = vmatprep.subr.mxu0 0.0
    %1598 = vmatpush1.msra.mxu0 0.0
    %1599 = vmatprep.subr.mxu0 0.0
    %1600 = vmatpush1.msra.mxu0 0.0
    %1601 = vmatprep.subr.mxu0 0.0
    %1602 = vmatpush1.msra.mxu0 0.0
    %1603 = vmatprep.subr.mxu0 0.0
    %1604 = vmatpush1.msra.mxu0 0.0
    %1605 = vmatprep.subr.mxu0 0.0
    %1606 = vmatpush1.msra.mxu0 0.0
    %1607 = vmatprep.subr.mxu0 0.0
    %1608 = vmatpush1.msra.mxu0 0.0
    %1609 = vmatprep.subr.mxu0 0.0
    %1610 = vmatpush1.msra.mxu0 0.0
    %1611 = vmatprep.subr.mxu0 0.0
    %1612 = vmatpush1.msra.mxu0 0.0
    %1613 = vmatprep.subr.mxu0 0.0
    %1614 = vmatpush1.msra.mxu0 0.0
    %1615 = vmatprep.subr.mxu0 0.0
    %1616 = vmatpush1.msra.mxu0 0.0
    %1617 = vmatprep.subr.mxu0 0.0
    %1618 = vmatpush1.msra.mxu0 0.0
    %1619 = vmatprep.subr.mxu0 0.0
    %1620 = vmatpush1.msra.mxu0 0.0
    %1621 = vmatprep.subr.mxu0 0.0
    %1622 = vmatpush1.msra.mxu0 0.0
    %1623 = vmatprep.subr.mxu0 0.0
    %1624 = vmatpush1.msra.mxu0 0.0
    %1625 = vmatprep.subr.mxu0 0.0
    %1626 = vmatpush1.msra.mxu0 0.0
    %1627 = vmatprep.subr.mxu0 0.0
    %1628 = vmatpush1.msra.mxu0 0.0
    %1629 = vmatprep.subr.mxu0 0.0
    %1630 = vmatpush1.msra.mxu0 0.0
    %1631 = vmatprep.mubr.f32.mxu0 0.0
    %1632 = vmatmul.mubr.f32.gmra.mrb[0].mxu0 %v1565
    %v1633 = vpop.f32.mrb[0].mxu0
    %v1634 = vadd.f32 0.0, %v1633
    %v1635 = vpop.f32.mrb[0].mxu0
    %1636 = vdwg.mxu0
    %v1637 = vadd.f32 %v1563, %v1634
    %v1638 = vtanh.pop %v1637
    %1639 = vst.msk [vmem:[#allocation4 + $0x18] sm:$0xff] %vm599, %v1638
    %1640 = vst.msk [vmem:[#allocation4 + $0x20] sm:$0xff] %vm500, %v1638
    %v1641 = vld [vmem:[#allocation3 + $0x20] sm:$0xff]
    %v1643 = vsel %vm489, %v1638, 0
    %1645 = vmatprep.subr.mxu0 0.0
    %1646 = vmatpush1.msra.mxu0 %v1324
    %1647 = vmatprep.subr.mxu0 0.0
    %1648 = vmatpush1.msra.mxu0 %v1325
    %1649 = vmatprep.subr.mxu0 0.0
    %1650 = vmatpush1.msra.mxu0 %v1326
    %1651 = vmatprep.subr.mxu0 0.0
    %1652 = vmatpush1.msra.mxu0 %v1327
    %1653 = vmatprep.subr.mxu0 0.0
    %1654 = vmatpush1.msra.mxu0 %v1328
    %1655 = vmatprep.subr.mxu0 0.0
    %1656 = vmatpush1.msra.mxu0 %v1329
    %1657 = vmatprep.subr.mxu0 0.0
    %1658 = vmatpush1.msra.mxu0 %v1330
    %1659 = vmatprep.subr.mxu0 0.0
    %1660 = vmatpush1.msra.mxu0 %v1331
    %1661 = vmatprep.subr.mxu0 0.0
    %1662 = vmatpush1.msra.mxu0 0.0
    %1663 = vmatprep.subr.mxu0 0.0
    %1664 = vmatpush1.msra.mxu0 0.0
    %1665 = vmatprep.subr.mxu0 0.0
    %1666 = vmatpush1.msra.mxu0 0.0
    %1667 = vmatprep.subr.mxu0 0.0
    %1668 = vmatpush1.msra.mxu0 0.0
    %1669 = vmatprep.subr.mxu0 0.0
    %1670 = vmatpush1.msra.mxu0 0.0
    %1671 = vmatprep.subr.mxu0 0.0
    %1672 = vmatpush1.msra.mxu0 0.0
    %1673 = vmatprep.subr.mxu0 0.0
    %1674 = vmatpush1.msra.mxu0 0.0
    %1675 = vmatprep.subr.mxu0 0.0
    %1676 = vmatpush1.msra.mxu0 0.0
    %1677 = vmatprep.subr.mxu0 0.0
    %1678 = vmatpush1.msra.mxu0 0.0
    %1679 = vmatprep.subr.mxu0 0.0
    %1680 = vmatpush1.msra.mxu0 0.0
    %1681 = vmatprep.subr.mxu0 0.0
    %1682 = vmatpush1.msra.mxu0 0.0
    %1683 = vmatprep.subr.mxu0 0.0
    %1684 = vmatpush1.msra.mxu0 0.0
    %1685 = vmatprep.subr.mxu0 0.0
    %1686 = vmatpush1.msra.mxu0 0.0
    %1687 = vmatprep.subr.mxu0 0.0
    %1688 = vmatpush1.msra.mxu0 0.0
    %1689 = vmatprep.subr.mxu0 0.0
    %1690 = vmatpush1.msra.mxu0 0.0
    %1691 = vmatprep.subr.mxu0 0.0
    %1692 = vmatpush1.msra.mxu0 0.0
    %1693 = vmatprep.subr.mxu0 0.0
    %1694 = vmatpush1.msra.mxu0 0.0
    %1695 = vmatprep.subr.mxu0 0.0
    %1696 = vmatpush1.msra.mxu0 0.0
    %1697 = vmatprep.subr.mxu0 0.0
    %1698 = vmatpush1.msra.mxu0 0.0
    %1699 = vmatprep.subr.mxu0 0.0
    %1700 = vmatpush1.msra.mxu0 0.0
    %1701 = vmatprep.subr.mxu0 0.0
    %1702 = vmatpush1.msra.mxu0 0.0
    %1703 = vmatprep.subr.mxu0 0.0
    %1704 = vmatpush1.msra.mxu0 0.0
    %1705 = vmatprep.subr.mxu0 0.0
    %1706 = vmatpush1.msra.mxu0 0.0
    %1707 = vmatprep.subr.mxu0 0.0
    %1708 = vmatpush1.msra.mxu0 0.0
    %1709 = vmatprep.mubr.f32.mxu0 0.0
    %1710 = vmatmul.mubr.f32.gmra.mrb[0].mxu0 %v1643
    %v1711 = vpop.f32.mrb[0].mxu0
    %v1712 = vadd.f32 0.0, %v1711
    %v1713 = vpop.f32.mrb[0].mxu0
    %1714 = vdwg.mxu0
    %v1715 = vadd.f32 %v1641, %v1712
    %v1716 = vtanh.pop %v1715
    %1717 = vst.msk [vmem:[#allocation4 + $0x20] sm:$0xff] %vm599, %v1716
    %1718 = vst.msk [vmem:[#allocation4 + $0x18] sm:$0xff] %vm500, %v1716
    %v1719 = vld [vmem:[#allocation3 + $0x28] sm:$0xff]
    %v1721 = vsel %vm489, %v1716, 0
    %1723 = vmatprep.subr.mxu0 0.0
    %1724 = vmatpush1.msra.mxu0 %v1324
    %1725 = vmatprep.subr.mxu0 0.0
    %1726 = vmatpush1.msra.mxu0 %v1325
    %1727 = vmatprep.subr.mxu0 0.0
    %1728 = vmatpush1.msra.mxu0 %v1326
    %1729 = vmatprep.subr.mxu0 0.0
    %1730 = vmatpush1.msra.mxu0 %v1327
    %1731 = vmatprep.subr.mxu0 0.0
    %1732 = vmatpush1.msra.mxu0 %v1328
    %1733 = vmatprep.subr.mxu0 0.0
    %1734 = vmatpush1.msra.mxu0 %v1329
    %1735 = vmatprep.subr.mxu0 0.0
    %1736 = vmatpush1.msra.mxu0 %v1330
    %1737 = vmatprep.subr.mxu0 0.0
    %1738 = vmatpush1.msra.mxu0 %v1331
    %1739 = vmatprep.subr.mxu0 0.0
    %1740 = vmatpush1.msra.mxu0 0.0
    %1741 = vmatprep.subr.mxu0 0.0
    %1742 = vmatpush1.msra.mxu0 0.0
    %1743 = vmatprep.subr.mxu0 0.0
    %1744 = vmatpush1.msra.mxu0 0.0
    %1745 = vmatprep.subr.mxu0 0.0
    %1746 = vmatpush1.msra.mxu0 0.0
    %1747 = vmatprep.subr.mxu0 0.0
    %1748 = vmatpush1.msra.mxu0 0.0
    %1749 = vmatprep.subr.mxu0 0.0
    %1750 = vmatpush1.msra.mxu0 0.0
    %1751 = vmatprep.subr.mxu0 0.0
    %1752 = vmatpush1.msra.mxu0 0.0
    %1753 = vmatprep.subr.mxu0 0.0
    %1754 = vmatpush1.msra.mxu0 0.0
    %1755 = vmatprep.subr.mxu0 0.0
    %1756 = vmatpush1.msra.mxu0 0.0
    %1757 = vmatprep.subr.mxu0 0.0
    %1758 = vmatpush1.msra.mxu0 0.0
    %1759 = vmatprep.subr.mxu0 0.0
    %1760 = vmatpush1.msra.mxu0 0.0
    %1761 = vmatprep.subr.mxu0 0.0
    %1762 = vmatpush1.msra.mxu0 0.0
    %1763 = vmatprep.subr.mxu0 0.0
    %1764 = vmatpush1.msra.mxu0 0.0
    %1765 = vmatprep.subr.mxu0 0.0
    %1766 = vmatpush1.msra.mxu0 0.0
    %1767 = vmatprep.subr.mxu0 0.0
    %1768 = vmatpush1.msra.mxu0 0.0
    %1769 = vmatprep.subr.mxu0 0.0
    %1770 = vmatpush1.msra.mxu0 0.0
    %1771 = vmatprep.subr.mxu0 0.0
    %1772 = vmatpush1.msra.mxu0 0.0
    %1773 = vmatprep.subr.mxu0 0.0
    %1774 = vmatpush1.msra.mxu0 0.0
    %1775 = vmatprep.subr.mxu0 0.0
    %1776 = vmatpush1.msra.mxu0 0.0
    %1777 = vmatprep.subr.mxu0 0.0
    %1778 = vmatpush1.msra.mxu0 0.0
    %1779 = vmatprep.subr.mxu0 0.0
    %1780 = vmatpush1.msra.mxu0 0.0
    %1781 = vmatprep.subr.mxu0 0.0
    %1782 = vmatpush1.msra.mxu0 0.0
    %1783 = vmatprep.subr.mxu0 0.0
    %1784 = vmatpush1.msra.mxu0 0.0
    %1785 = vmatprep.subr.mxu0 0.0
    %1786 = vmatpush1.msra.mxu0 0.0
    %1787 = vmatprep.mubr.f32.mxu0 0.0
    %1788 = vmatmul.mubr.f32.gmra.mrb[0].mxu0 %v1721
    %v1789 = vpop.f32.mrb[0].mxu0
    %v1790 = vadd.f32 0.0, %v1789
    %v1791 = vpop.f32.mrb[0].mxu0
    %1792 = vdwg.mxu0
    %v1793 = vadd.f32 %v1719, %v1790
    %v1794 = vtanh.pop %v1793
    %1795 = vst.msk [vmem:[#allocation4 + $0x28] sm:$0xff] %vm599, %v1794
    %1796 = vst.msk [vmem:[#allocation4 + $0x10] sm:$0xff] %vm500, %v1794
    %v1797 = vld [vmem:[#allocation3 + $0x30] sm:$0xff]
    %v1799 = vsel %vm489, %v1794, 0
    %1801 = vmatprep.subr.mxu0 0.0
    %1802 = vmatpush1.msra.mxu0 %v1324
    %1803 = vmatprep.subr.mxu0 0.0
    %1804 = vmatpush1.msra.mxu0 %v1325
    %1805 = vmatprep.subr.mxu0 0.0
    %1806 = vmatpush1.msra.mxu0 %v1326
    %1807 = vmatprep.subr.mxu0 0.0
    %1808 = vmatpush1.msra.mxu0 %v1327
    %1809 = vmatprep.subr.mxu0 0.0
    %1810 = vmatpush1.msra.mxu0 %v1328
    %1811 = vmatprep.subr.mxu0 0.0
    %1812 = vmatpush1.msra.mxu0 %v1329
    %1813 = vmatprep.subr.mxu0 0.0
    %1814 = vmatpush1.msra.mxu0 %v1330
    %1815 = vmatprep.subr.mxu0 0.0
    %1816 = vmatpush1.msra.mxu0 %v1331
    %1817 = vmatprep.subr.mxu0 0.0
    %1818 = vmatpush1.msra.mxu0 0.0
    %1819 = vmatprep.subr.mxu0 0.0
    %1820 = vmatpush1.msra.mxu0 0.0
    %1821 = vmatprep.subr.mxu0 0.0
    %1822 = vmatpush1.msra.mxu0 0.0
    %1823 = vmatprep.subr.mxu0 0.0
    %1824 = vmatpush1.msra.mxu0 0.0
    %1825 = vmatprep.subr.mxu0 0.0
    %1826 = vmatpush1.msra.mxu0 0.0
    %1827 = vmatprep.subr.mxu0 0.0
    %1828 = vmatpush1.msra.mxu0 0.0
    %1829 = vmatprep.subr.mxu0 0.0
    %1830 = vmatpush1.msra.mxu0 0.0
    %1831 = vmatprep.subr.mxu0 0.0
    %1832 = vmatpush1.msra.mxu0 0.0
    %1833 = vmatprep.subr.mxu0 0.0
    %1834 = vmatpush1.msra.mxu0 0.0
    %1835 = vmatprep.subr.mxu0 0.0
    %1836 = vmatpush1.msra.mxu0 0.0
    %1837 = vmatprep.subr.mxu0 0.0
    %1838 = vmatpush1.msra.mxu0 0.0
    %1839 = vmatprep.subr.mxu0 0.0
    %1840 = vmatpush1.msra.mxu0 0.0
    %1841 = vmatprep.subr.mxu0 0.0
    %1842 = vmatpush1.msra.mxu0 0.0
    %1843 = vmatprep.subr.mxu0 0.0
    %1844 = vmatpush1.msra.mxu0 0.0
    %1845 = vmatprep.subr.mxu0 0.0
    %1846 = vmatpush1.msra.mxu0 0.0
    %1847 = vmatprep.subr.mxu0 0.0
    %1848 = vmatpush1.msra.mxu0 0.0
    %1849 = vmatprep.subr.mxu0 0.0
    %1850 = vmatpush1.msra.mxu0 0.0
    %1851 = vmatprep.subr.mxu0 0.0
    %1852 = vmatpush1.msra.mxu0 0.0
    %1853 = vmatprep.subr.mxu0 0.0
    %1854 = vmatpush1.msra.mxu0 0.0
    %1855 = vmatprep.subr.mxu0 0.0
    %1856 = vmatpush1.msra.mxu0 0.0
    %1857 = vmatprep.subr.mxu0 0.0
    %1858 = vmatpush1.msra.mxu0 0.0
    %1859 = vmatprep.subr.mxu0 0.0
    %1860 = vmatpush1.msra.mxu0 0.0
    %1861 = vmatprep.subr.mxu0 0.0
    %1862 = vmatpush1.msra.mxu0 0.0
    %1863 = vmatprep.subr.mxu0 0.0
    %1864 = vmatpush1.msra.mxu0 0.0
    %1865 = vmatprep.mubr.f32.mxu0 0.0
    %1866 = vmatmul.mubr.f32.gmra.mrb[0].mxu0 %v1799
    %v1867 = vpop.f32.mrb[0].mxu0
    %v1868 = vadd.f32 0.0, %v1867
    %v1869 = vpop.f32.mrb[0].mxu0
    %1870 = vdwg.mxu0
    %v1871 = vadd.f32 %v1797, %v1868
    %v1872 = vtanh.pop %v1871
    %1873 = vst.msk [vmem:[#allocation4 + $0x30] sm:$0xff] %vm599, %v1872
    %1874 = vst.msk [vmem:[#allocation4 + $0x8] sm:$0xff] %vm500, %v1872
    %v1875 = vld [vmem:[#allocation3 + $0x38] sm:$0xff]
    %v1877 = vsel %vm489, %v1872, 0
    %1879 = vmatprep.subr.mxu0 0.0
    %1880 = vmatpush1.msra.mxu0 %v1324
    %1881 = vmatprep.subr.mxu0 0.0
    %1882 = vmatpush1.msra.mxu0 %v1325
    %1883 = vmatprep.subr.mxu0 0.0
    %1884 = vmatpush1.msra.mxu0 %v1326
    %1885 = vmatprep.subr.mxu0 0.0
    %1886 = vmatpush1.msra.mxu0 %v1327
    %1887 = vmatprep.subr.mxu0 0.0
    %1888 = vmatpush1.msra.mxu0 %v1328
    %1889 = vmatprep.subr.mxu0 0.0
    %1890 = vmatpush1.msra.mxu0 %v1329
    %1891 = vmatprep.subr.mxu0 0.0
    %1892 = vmatpush1.msra.mxu0 %v1330
    %1893 = vmatprep.subr.mxu0 0.0
    %1894 = vmatpush1.msra.mxu0 %v1331
    %1895 = vmatprep.subr.mxu0 0.0
    %1896 = vmatpush1.msra.mxu0 0.0
    %1897 = vmatprep.subr.mxu0 0.0
    %1898 = vmatpush1.msra.mxu0 0.0
    %1899 = vmatprep.subr.mxu0 0.0
    %1900 = vmatpush1.msra.mxu0 0.0
    %1901 = vmatprep.subr.mxu0 0.0
    %1902 = vmatpush1.msra.mxu0 0.0
    %1903 = vmatprep.subr.mxu0 0.0
    %1904 = vmatpush1.msra.mxu0 0.0
    %1905 = vmatprep.subr.mxu0 0.0
    %1906 = vmatpush1.msra.mxu0 0.0
    %1907 = vmatprep.subr.mxu0 0.0
    %1908 = vmatpush1.msra.mxu0 0.0
    %1909 = vmatprep.subr.mxu0 0.0
    %1910 = vmatpush1.msra.mxu0 0.0
    %1911 = vmatprep.subr.mxu0 0.0
    %1912 = vmatpush1.msra.mxu0 0.0
    %1913 = vmatprep.subr.mxu0 0.0
    %1914 = vmatpush1.msra.mxu0 0.0
    %1915 = vmatprep.subr.mxu0 0.0
    %1916 = vmatpush1.msra.mxu0 0.0
    %1917 = vmatprep.subr.mxu0 0.0
    %1918 = vmatpush1.msra.mxu0 0.0
    %1919 = vmatprep.subr.mxu0 0.0
    %1920 = vmatpush1.msra.mxu0 0.0
    %1921 = vmatprep.subr.mxu0 0.0
    %1922 = vmatpush1.msra.mxu0 0.0
    %1923 = vmatprep.subr.mxu0 0.0
    %1924 = vmatpush1.msra.mxu0 0.0
    %1925 = vmatprep.subr.mxu0 0.0
    %1926 = vmatpush1.msra.mxu0 0.0
    %1927 = vmatprep.subr.mxu0 0.0
    %1928 = vmatpush1.msra.mxu0 0.0
    %1929 = vmatprep.subr.mxu0 0.0
    %1930 = vmatpush1.msra.mxu0 0.0
    %1931 = vmatprep.subr.mxu0 0.0
    %1932 = vmatpush1.msra.mxu0 0.0
    %1933 = vmatprep.subr.mxu0 0.0
    %1934 = vmatpush1.msra.mxu0 0.0
    %1935 = vmatprep.subr.mxu0 0.0
    %1936 = vmatpush1.msra.mxu0 0.0
    %1937 = vmatprep.subr.mxu0 0.0
    %1938 = vmatpush1.msra.mxu0 0.0
    %1939 = vmatprep.subr.mxu0 0.0
    %1940 = vmatpush1.msra.mxu0 0.0
    %1941 = vmatprep.subr.mxu0 0.0
    %1942 = vmatpush1.msra.mxu0 0.0
    %1943 = vmatprep.mubr.f32.mxu0 0.0
    %1944 = vmatmul.mubr.f32.gmra.mrb[0].mxu0 %v1877
    %v1945 = vpop.f32.mrb[0].mxu0
    %v1946 = vadd.f32 0.0, %v1945
    %v1947 = vpop.f32.mrb[0].mxu0
    %1948 = vdwg.mxu0
    %v1949 = vadd.f32 %v1875, %v1946
    %v1950 = vtanh.pop %v1949
    %1951 = vst.msk [vmem:[#allocation4 + $0x38] sm:$0xff] %vm599, %v1950
    %1952 = vst.msk [vmem:[#allocation4] sm:$0xff] %vm500, %v1950
    %1954 = vrot.lane.b32.xlu0 %v1950, 64
    %v1955 = vpop.permute.xlu0 %1954
    %v1957 = vsel %vm489, %v1145, %v1955
    %v1958 = vrot.slane %v1957, 4
    %v1959 = vadd.f32 %v1957, %v1958
    %v1960 = vrot.slane %v1959, 2
    %v1961 = vadd.f32 %v1959, %v1960
    %v1962 = vrot.slane %v1961, 1
    %v1963 = vadd.f32 %v1961, %v1962
    %v1964 = vrcp.pop 8.0
    %v1965 = vmul.f32 %v1963, %v1964
    %v1966 = vsub.f32 %v1957, %v1965
    %v1967 = vmul.f32 %v1966, %v1966
    %v1968 = vrot.slane %v1967, 4
    %v1969 = vadd.f32 %v1967, %v1968
    %v1970 = vrot.slane %v1969, 2
    %v1971 = vadd.f32 %v1969, %v1970
    %v1972 = vrot.slane %v1971, 1
    %v1973 = vadd.f32 %v1971, %v1972
    %v1974 = vmul.f32 %v1973, %v1964
    %v1975 = vadd.f32 %v1974, 1e-05
    %v1976 = vrsqrt.pop %v1975
    %v1977 = vmul.f32 %v1966, %v1976
    %v1978 = vld [vmem:[%s7] sm:$0x1]
    %v1980 = vlaneseq
    %v1981 = vshrl.u32 %v1980, 7
    %v1982 = vsub.s32 0, %v1981
    %v1983 = vrot.slane %v1978, %v1982
    %v1985 = vmul.f32 %v1977, %v1983
    %v1986 = vld [vmem:[%s8] sm:$0x1]
    %v1988 = vlaneseq
    %v1989 = vshrl.u32 %v1988, 7
    %v1990 = vsub.s32 0, %v1989
    %v1991 = vrot.slane %v1986, %v1990
    %v1993 = vadd.f32 %v1985, %v1991
    %v1994 = vld [vmem:[%s9] sm:$0xff]
    %v1995 = vld [vmem:[%s9 + $0x8] sm:$0xff]
    %v1996 = vld [vmem:[%s9 + $0x10] sm:$0xff]
    %v1997 = vld [vmem:[%s9 + $0x18] sm:$0xff]
    %v1998 = vld [vmem:[%s9 + $0x20] sm:$0xff]
    %v1999 = vld [vmem:[%s9 + $0x28] sm:$0xff]
    %v2000 = vld [vmem:[%s9 + $0x30] sm:$0xff]
    %v2001 = vld [vmem:[%s9 + $0x38] sm:$0xff]
    %v2002 = vld [vmem:[%s9 + $0x40] sm:$0xff]
    %v2003 = vld [vmem:[%s9 + $0x48] sm:$0xff]
    %v2004 = vld [vmem:[%s9 + $0x50] sm:$0xff]
    %v2005 = vld [vmem:[%s9 + $0x58] sm:$0xff]
    %v2006 = vld [vmem:[%s9 + $0x60] sm:$0xff]
    %v2007 = vld [vmem:[%s9 + $0x68] sm:$0xff]
    %v2008 = vld [vmem:[%s9 + $0x70] sm:$0xff]
    %v2009 = vld [vmem:[%s9 + $0x78] sm:$0xff]
    %v2010 = vld [vmem:[%s10] sm:$0x1]
    %v2012 = vlaneseq
    %v2013 = vshrl.u32 %v2012, 7
    %v2014 = vsub.s32 0, %v2013
    %v2015 = vrot.slane %v2010, %v2014
    %2017 = vmatprep.subr.mxu0 0.0
    %2018 = vmatpush1.msra.mxu0 %v1994
    %2019 = vmatprep.subr.mxu0 0.0
    %2020 = vmatpush1.msra.mxu0 %v1995
    %2021 = vmatprep.subr.mxu0 0.0
    %2022 = vmatpush1.msra.mxu0 %v1996
    %2023 = vmatprep.subr.mxu0 0.0
    %2024 = vmatpush1.msra.mxu0 %v1997
    %2025 = vmatprep.subr.mxu0 0.0
    %2026 = vmatpush1.msra.mxu0 %v1998
    %2027 = vmatprep.subr.mxu0 0.0
    %2028 = vmatpush1.msra.mxu0 %v1999
    %2029 = vmatprep.subr.mxu0 0.0
    %2030 = vmatpush1.msra.mxu0 %v2000
    %2031 = vmatprep.subr.mxu0 0.0
    %2032 = vmatpush1.msra.mxu0 %v2001
    %2033 = vmatprep.subr.mxu0 0.0
    %2034 = vmatpush1.msra.mxu0 %v2002
    %2035 = vmatprep.subr.mxu0 0.0
    %2036 = vmatpush1.msra.mxu0 %v2003
    %2037 = vmatprep.subr.mxu0 0.0
    %2038 = vmatpush1.msra.mxu0 %v2004
    %2039 = vmatprep.subr.mxu0 0.0
    %2040 = vmatpush1.msra.mxu0 %v2005
    %2041 = vmatprep.subr.mxu0 0.0
    %2042 = vmatpush1.msra.mxu0 %v2006
    %2043 = vmatprep.subr.mxu0 0.0
    %2044 = vmatpush1.msra.mxu0 %v2007
    %2045 = vmatprep.subr.mxu0 0.0
    %2046 = vmatpush1.msra.mxu0 %v2008
    %2047 = vmatprep.subr.mxu0 0.0
    %2048 = vmatpush1.msra.mxu0 %v2009
    %2049 = vmatprep.subr.mxu0 0.0
    %2050 = vmatpush1.msra.mxu0 0.0
    %2051 = vmatprep.subr.mxu0 0.0
    %2052 = vmatpush1.msra.mxu0 0.0
    %2053 = vmatprep.subr.mxu0 0.0
    %2054 = vmatpush1.msra.mxu0 0.0
    %2055 = vmatprep.subr.mxu0 0.0
    %2056 = vmatpush1.msra.mxu0 0.0
    %2057 = vmatprep.subr.mxu0 0.0
    %2058 = vmatpush1.msra.mxu0 0.0
    %2059 = vmatprep.subr.mxu0 0.0
    %2060 = vmatpush1.msra.mxu0 0.0
    %2061 = vmatprep.subr.mxu0 0.0
    %2062 = vmatpush1.msra.mxu0 0.0
    %2063 = vmatprep.subr.mxu0 0.0
    %2064 = vmatpush1.msra.mxu0 0.0
    %2065 = vmatprep.subr.mxu0 0.0
    %2066 = vmatpush1.msra.mxu0 0.0
    %2067 = vmatprep.subr.mxu0 0.0
    %2068 = vmatpush1.msra.mxu0 0.0
    %2069 = vmatprep.subr.mxu0 0.0
    %2070 = vmatpush1.msra.mxu0 0.0
    %2071 = vmatprep.subr.mxu0 0.0
    %2072 = vmatpush1.msra.mxu0 0.0
    %2073 = vmatprep.subr.mxu0 0.0
    %2074 = vmatpush1.msra.mxu0 0.0
    %2075 = vmatprep.subr.mxu0 0.0
    %2076 = vmatpush1.msra.mxu0 0.0
    %2077 = vmatprep.subr.mxu0 0.0
    %2078 = vmatpush1.msra.mxu0 0.0
    %2079 = vmatprep.subr.mxu0 0.0
    %2080 = vmatpush1.msra.mxu0 0.0
    %2081 = vmatprep.mubr.f32.mxu0 0.0
    %2082 = vmatmul.mubr.f32.gmra.mrb[0].mxu0 %v1993
    %v2083 = vpop.f32.mrb[0].mxu0
    %v2084 = vadd.f32 %v2015, %v2083
    %v2085 = vpop.f32.mrb[0].mxu0
    %2086 = vdwg.mxu0
    %vm2087 = vcmask 31744
    %2088 = vst.msk [vmem:[%s11] sm:$0xff] %vm2087, %v2084
    // Predicated region
    $region58: #{tc_base_forward.1} parent=1 // pred_check
      _
    $region59: #{tc_base_forward.1} parent=1 // pred_check_branch
      %2090 = sbr.rel (0) target = $region61
    $region60: #{tc_base_forward.1} parent=1 // pred_region
      _
    $region61: #{tc_base_forward.1} parent=1 // pred_fallthru
      _
    // Predicated region
    $region62: #{tc_base_forward.1} parent=1 // pred_check
      _
    $region63: #{tc_base_forward.1} parent=1 // pred_check_branch
      %2092 = sbr.rel (0) target = $region65
    $region64: #{tc_base_forward.1} parent=1 // pred_region
      _
    $region65: #{tc_base_forward.1} parent=1 // pred_fallthru
      _
    %2093 = vsyncpa [#allocation6], 1
    %2094 = vsyncpa [#allocation8], 1

</llo_original>
